<compile_context>
chip_gen: v5e
topology: v5e:2x2
jax: 0.10.0
libtpu: 0.0.40
codegen_flags: <defaults>
</compile_context>

<pallas_src>
import jax
import jax.numpy as jnp
from jax import lax
from jax.experimental import pallas as pl
from jax.experimental.pallas import tpu as pltpu

BATCH_SIZE = 16     # data.BATCH_SIZE (== LSTM hidden size, Linear size, conv length)
CHANNELS   = 2      # in_
KSIZE      = 3
NUM_LAYERS = 16
OUT_CH     = 1
NB         = 8      # number of conv "batches" == LSTM sequence length
H          = BATCH_SIZE
LOUT       = BATCH_SIZE - KSIZE + 1     # 14


def _sigmoid(x):
    return 1.0 / (1.0 + jnp.exp(-x))


# --------------------- fused conv + pad + LSTM stack + Linear ---------------------
def fused_kernel(x_ref, cw_ref, cb_ref, wihT_ref, whhT_ref, b_ref,
                 h0_ref, c0_ref, wlinT_ref, blin_ref, o_ref, pad_ref):
    # ---- Conv1d + bias + ReLU (VPU, exact) ----
    x = x_ref[...]                                       # (NB, C, L)
    acc = jnp.zeros((NB, LOUT), jnp.float32)
    for c in range(CHANNELS):
        for k in range(KSIZE):
            acc = acc + x[:, c, k:k + LOUT] * cw_ref[c * KSIZE + k]
    y = jnp.maximum(acc + cb_ref[0], 0.0)                # (NB, LOUT)

    # ---- zero-pad features LOUT -> H (layer-0 W_ih^T has zero rows >= LOUT) ----
    pad_ref[...] = jnp.zeros((NB, H), jnp.float32)
    pad_ref[:, 0:LOUT] = y
    seq0 = pad_ref[...]                                  # (NB, H)

    row = lax.broadcasted_iota(jnp.int32, (NB, H), 0)    # hoisted (reused every layer)

    # ---- 16-layer LSTM; all layer weights resident, dynamic leading-dim index ----
    def layer_body(l, seq):
        wihT_l = wihT_ref[l]                             # (H, 4H)
        whhT_l = whhT_ref[l]                             # (H, 4H)
        # hoisted input projection + bias: one well-shaped matmul per layer
        xw = jnp.dot(seq, wihT_l, preferred_element_type=jnp.float32) + b_ref[l]
        h = h0_ref[l]                                    # (1, H)
        c = c0_ref[l]                                    # (1, H)
        seq_new = jnp.zeros((NB, H), jnp.float32)
        for t in range(NB):                              # fully unrolled recurrence
            gates = xw[t:t + 1, :] + jnp.dot(
                h, whhT_l, preferred_element_type=jnp.float32)   # (1, 4H) i,f,g,o
            i = _sigmoid(gates[:, 0:H])
            f = _sigmoid(gates[:, H:2 * H])
            g = jnp.tanh(gates[:, 2 * H:3 * H])
            o = _sigmoid(gates[:, 3 * H:4 * H])
            c = f * c + i * g
            h = o * jnp.tanh(c)
            seq_new = jnp.where(row == t, h, seq_new)    # keep sequence in vregs
        return seq_new

    seq = lax.fori_loop(0, NUM_LAYERS, layer_body, seq0)

    # ---- final Linear(H, H) ----
    o_ref[...] = (jnp.dot(seq, wlinT_ref[...], preferred_element_type=jnp.float32)
                  + blin_ref[...])


def model_forward(train, P):
    return pl.pallas_call(
        fused_kernel,
        out_shape=jax.ShapeDtypeStruct((NB, H), jnp.float32),
        in_specs=[
            pl.BlockSpec(memory_space=pltpu.MemorySpace.VMEM),   # conv input (NB, C, L)
            pl.BlockSpec(memory_space=pltpu.MemorySpace.SMEM),   # conv weights (6,)
            pl.BlockSpec(memory_space=pltpu.MemorySpace.SMEM),   # conv bias (1,)
            pl.BlockSpec(memory_space=pltpu.MemorySpace.VMEM),   # W_ih^T (16, H, 4H)
            pl.BlockSpec(memory_space=pltpu.MemorySpace.VMEM),   # W_hh^T (16, H, 4H)
            pl.BlockSpec(memory_space=pltpu.MemorySpace.VMEM),   # b_ih+b_hh (16, 1, 4H)
            pl.BlockSpec(memory_space=pltpu.MemorySpace.VMEM),   # h0 (16, 1, H)
            pl.BlockSpec(memory_space=pltpu.MemorySpace.VMEM),   # c0 (16, 1, H)
            pl.BlockSpec(memory_space=pltpu.MemorySpace.VMEM),   # W_lin^T (H, H)
            pl.BlockSpec(memory_space=pltpu.MemorySpace.VMEM),   # b_lin (1, H)
        ],
        out_specs=pl.BlockSpec(memory_space=pltpu.MemorySpace.VMEM),
        scratch_shapes=[pltpu.VMEM((NB, H), jnp.float32)],       # padded conv output
    )(train, P["conv_w"].reshape(-1), P["conv_b"],
      P["wihT"], P["whhT"], P["bsum"], P["h0"], P["c0"],
      P["wlinT"], P["blin"])


# ----------------------------------- params ---------------------------------------
def init_params(key):
    ks = jax.random.split(key, 11)
    s = 1.0 / (H ** 0.5)

    conv_w = jax.random.normal(ks[0], (OUT_CH, CHANNELS, KSIZE), jnp.float32) * 0.5
    conv_b = jax.random.normal(ks[1], (OUT_CH,), jnp.float32) * 0.1

    wih0 = jax.random.uniform(ks[2], (4 * H, LOUT), jnp.float32, -s, s)
    wih_rest = jax.random.uniform(ks[3], (NUM_LAYERS - 1, 4 * H, H), jnp.float32, -s, s)
    whh = jax.random.uniform(ks[4], (NUM_LAYERS, 4 * H, H), jnp.float32, -s, s)
    bih = jax.random.uniform(ks[5], (NUM_LAYERS, 4 * H), jnp.float32, -s, s)
    bhh = jax.random.uniform(ks[6], (NUM_LAYERS, 4 * H), jnp.float32, -s, s)
    h0 = jax.random.normal(ks[7], (NUM_LAYERS, OUT_CH, H), jnp.float32)
    c0 = jax.random.normal(ks[8], (NUM_LAYERS, OUT_CH, H), jnp.float32)
    lin_w = jax.random.uniform(ks[9], (H, H), jnp.float32, -s, s)
    lin_b = jax.random.uniform(ks[10], (H,), jnp.float32, -s, s)

    # kernel-friendly packing (layer-0 W_ih padded with zero input-feature columns)
    wih0_pad = jnp.pad(wih0, ((0, 0), (0, H - LOUT)))
    wih_all = jnp.concatenate([wih0_pad[None], wih_rest], 0)      # (16, 4H, H)
    return {
        "conv_w": conv_w, "conv_b": conv_b,
        "wih_list": [wih0] + [wih_rest[i] for i in range(NUM_LAYERS - 1)],
        "whh": whh, "bih": bih, "bhh": bhh,
        "h0": h0, "c0": c0, "lin_w": lin_w, "lin_b": lin_b,
        "wihT": jnp.transpose(wih_all, (0, 2, 1)),                # (16, H, 4H)
        "whhT": jnp.transpose(whh, (0, 2, 1)),                    # (16, H, 4H)
        "bsum": (bih + bhh).reshape(NUM_LAYERS, 1, 4 * H),
        "wlinT": lin_w.T,
        "blin": lin_b.reshape(1, H),
    }


# --------------------------------- pure-JAX ref ------------------------------------
def ref_forward(train, P):
    """PyTorch eval-mode semantics, pure JAX."""
    nb, c_in, L = train.shape
    y = jnp.zeros((nb, LOUT), jnp.float32)
    for c in range(c_in):
        for k in range(KSIZE):
            y = y + train[:, c, k:k + LOUT] * P["conv_w"][0, c, k]
    y = jnp.maximum(y + P["conv_b"][0], 0.0)     # (seq=nb, batch=1 squeezed, feat=LOUT)
    x = y
    for l in range(NUM_LAYERS):
        wih, whh = P["wih_list"][l], P["whh"][l]
        bb = P["bih"][l] + P["bhh"][l]
        h, c = P["h0"][l, 0], P["c0"][l, 0]
        outs = []
        for t in range(nb):
            gates = wih @ x[t] + whh @ h + bb
            i = _sigmoid(gates[0:H]); f = _sigmoid(gates[H:2 * H])
            g = jnp.tanh(gates[2 * H:3 * H]); o = _sigmoid(gates[3 * H:4 * H])
            c = f * c + i * g
            h = o * jnp.tanh(c)
            outs.append(h)
        x = jnp.stack(outs, 0)
    return x @ P["lin_w"].T + P["lin_b"]


if __name__ == "__main__":
    key = jax.random.PRNGKey(0)
    k_x, k_p = jax.random.split(key)
    train = jax.random.normal(k_x, (NB, CHANNELS, BATCH_SIZE), jnp.float32)
    params = init_params(k_p)

    out = model_forward(train, params)
    out = jax.block_until_ready(out)

    ref = jax.block_until_ready(ref_forward(train, params))
    assert out.shape == (NB, BATCH_SIZE), out.shape
    max_err = float(jnp.max(jnp.abs(out - ref)))
    assert max_err < 2e-3, f"mismatch vs reference: {max_err}"
    print("KERNEL_OK")
</pallas_src>

<mosaic_0001>
module attributes {stable_mosaic.version = 11 : i64} {
  func.func @fused_kernel(%arg0: memref<8x2x16xf32, #tpu.memory_space<vmem>>, %arg1: memref<6xf32, #tpu.memory_space<smem>>, %arg2: memref<1xf32, #tpu.memory_space<smem>>, %arg3: memref<16x16x64xf32, #tpu.memory_space<vmem>>, %arg4: memref<16x16x64xf32, #tpu.memory_space<vmem>>, %arg5: memref<16x1x64xf32, #tpu.memory_space<vmem>>, %arg6: memref<16x1x16xf32, #tpu.memory_space<vmem>>, %arg7: memref<16x1x16xf32, #tpu.memory_space<vmem>>, %arg8: memref<16x16xf32, #tpu.memory_space<vmem>>, %arg9: memref<1x16xf32, #tpu.memory_space<vmem>>, %arg10: memref<8x16xf32, #tpu.memory_space<vmem>>, %arg11: memref<8x16xf32, #tpu.memory_space<vmem>>) attributes {dimension_semantics = [], scalar_prefetch = 0 : i64, scratch_operands = 1 : i64, tpu.core_type = #tpu.core_type<tc>} {
    %c0 = arith.constant 0 : index
    %c0_0 = arith.constant 0 : index
    %c0_1 = arith.constant 0 : index
    %0 = vector.load %arg0[%c0, %c0_0, %c0_1] : memref<8x2x16xf32, #tpu.memory_space<vmem>>, vector<8x2x16xf32>
    %cst = arith.constant 0.000000e+00 : f32
    %1 = vector.broadcast %cst : f32 to vector<8x14xf32>
    %2 = vector.extract_strided_slice %0 {offsets = [0, 0, 0], sizes = [8, 1, 14], strides = [1, 1, 1]} : vector<8x2x16xf32> to vector<8x1x14xf32>
    %3 = vector.shape_cast %2 : vector<8x1x14xf32> to vector<8x14xf32>
    %c0_2 = arith.constant 0 : index
    %4 = memref.load %arg1[%c0_2] : memref<6xf32, #tpu.memory_space<smem>>
    %5 = vector.broadcast %4 : f32 to vector<8x14xf32>
    %6 = arith.mulf %3, %5 : vector<8x14xf32>
    %7 = arith.addf %1, %6 : vector<8x14xf32>
    %8 = vector.extract_strided_slice %0 {offsets = [0, 0, 1], sizes = [8, 1, 14], strides = [1, 1, 1]} : vector<8x2x16xf32> to vector<8x1x14xf32>
    %9 = vector.shape_cast %8 : vector<8x1x14xf32> to vector<8x14xf32>
    %c1 = arith.constant 1 : index
    %10 = memref.load %arg1[%c1] : memref<6xf32, #tpu.memory_space<smem>>
    %11 = vector.broadcast %10 : f32 to vector<8x14xf32>
    %12 = arith.mulf %9, %11 : vector<8x14xf32>
    %13 = arith.addf %7, %12 : vector<8x14xf32>
    %14 = vector.extract_strided_slice %0 {offsets = [0, 0, 2], sizes = [8, 1, 14], strides = [1, 1, 1]} : vector<8x2x16xf32> to vector<8x1x14xf32>
    %15 = vector.shape_cast %14 : vector<8x1x14xf32> to vector<8x14xf32>
    %c2 = arith.constant 2 : index
    %16 = memref.load %arg1[%c2] : memref<6xf32, #tpu.memory_space<smem>>
    %17 = vector.broadcast %16 : f32 to vector<8x14xf32>
    %18 = arith.mulf %15, %17 : vector<8x14xf32>
    %19 = arith.addf %13, %18 : vector<8x14xf32>
    %20 = vector.extract_strided_slice %0 {offsets = [0, 1, 0], sizes = [8, 1, 14], strides = [1, 1, 1]} : vector<8x2x16xf32> to vector<8x1x14xf32>
    %21 = vector.shape_cast %20 : vector<8x1x14xf32> to vector<8x14xf32>
    %c3 = arith.constant 3 : index
    %22 = memref.load %arg1[%c3] : memref<6xf32, #tpu.memory_space<smem>>
    %23 = vector.broadcast %22 : f32 to vector<8x14xf32>
    %24 = arith.mulf %21, %23 : vector<8x14xf32>
    %25 = arith.addf %19, %24 : vector<8x14xf32>
    %26 = vector.extract_strided_slice %0 {offsets = [0, 1, 1], sizes = [8, 1, 14], strides = [1, 1, 1]} : vector<8x2x16xf32> to vector<8x1x14xf32>
    %27 = vector.shape_cast %26 : vector<8x1x14xf32> to vector<8x14xf32>
    %c4 = arith.constant 4 : index
    %28 = memref.load %arg1[%c4] : memref<6xf32, #tpu.memory_space<smem>>
    %29 = vector.broadcast %28 : f32 to vector<8x14xf32>
    %30 = arith.mulf %27, %29 : vector<8x14xf32>
    %31 = arith.addf %25, %30 : vector<8x14xf32>
    %32 = vector.extract_strided_slice %0 {offsets = [0, 1, 2], sizes = [8, 1, 14], strides = [1, 1, 1]} : vector<8x2x16xf32> to vector<8x1x14xf32>
    %33 = vector.shape_cast %32 : vector<8x1x14xf32> to vector<8x14xf32>
    %c5 = arith.constant 5 : index
    %34 = memref.load %arg1[%c5] : memref<6xf32, #tpu.memory_space<smem>>
    %35 = vector.broadcast %34 : f32 to vector<8x14xf32>
    %36 = arith.mulf %33, %35 : vector<8x14xf32>
    %37 = arith.addf %31, %36 : vector<8x14xf32>
    %c0_3 = arith.constant 0 : index
    %38 = memref.load %arg2[%c0_3] : memref<1xf32, #tpu.memory_space<smem>>
    %39 = vector.broadcast %38 : f32 to vector<8x14xf32>
    %40 = arith.addf %37, %39 : vector<8x14xf32>
    %cst_4 = arith.constant 0.000000e+00 : f32
    %41 = vector.broadcast %cst_4 : f32 to vector<8x14xf32>
    %42 = arith.maximumf %40, %41 : vector<8x14xf32>
    %cst_5 = arith.constant 0.000000e+00 : f32
    %43 = vector.broadcast %cst_5 : f32 to vector<8x16xf32>
    %c0_6 = arith.constant 0 : index
    %c0_7 = arith.constant 0 : index
    %44 = vector.load %arg11[%c0_6, %c0_7] : memref<8x16xf32, #tpu.memory_space<vmem>>, vector<8x16xf32>
    tpu.vector_store %arg11[%c0_6, %c0_7], %43 {strides = array<i32>} : memref<8x16xf32, #tpu.memory_space<vmem>>, vector<8x16xf32>,
    %c0_8 = arith.constant 0 : index
    %c0_9 = arith.constant 0 : index
    %45 = vector.load %arg11[%c0_8, %c0_9] : memref<8x16xf32, #tpu.memory_space<vmem>>, vector<8x14xf32>
    tpu.vector_store %arg11[%c0_8, %c0_9], %42 {strides = array<i32>} : memref<8x16xf32, #tpu.memory_space<vmem>>, vector<8x14xf32>,
    %c0_10 = arith.constant 0 : index
    %c0_11 = arith.constant 0 : index
    %46 = vector.load %arg11[%c0_10, %c0_11] : memref<8x16xf32, #tpu.memory_space<vmem>>, vector<8x16xf32>
    %47 = tpu.iota {dimensions = array<i32: 0>} : vector<8x16xi32>
    %c0_i32 = arith.constant 0 : i32
    %c16_i32 = arith.constant 16 : i32
    %48 = arith.addi %c0_i32, %c16_i32 : i32
    %c1_i32 = arith.constant 1 : i32
    %49 = scf.for %arg12 = %c0_i32 to %48 step %c1_i32 iter_args(%arg13 = %46) -> (vector<8x16xf32>)  : i32 {
      %56 = arith.index_cast %arg12 : i32 to index
      %c0_20 = arith.constant 0 : index
      %c0_21 = arith.constant 0 : index
      %57 = vector.load %arg3[%56, %c0_20, %c0_21] : memref<16x16x64xf32, #tpu.memory_space<vmem>>, vector<1x16x64xf32>
      %58 = vector.shape_cast %57 : vector<1x16x64xf32> to vector<16x64xf32>
      %59 = arith.index_cast %arg12 : i32 to index
      %c0_22 = arith.constant 0 : index
      %c0_23 = arith.constant 0 : index
      %60 = vector.load %arg4[%59, %c0_22, %c0_23] : memref<16x16x64xf32, #tpu.memory_space<vmem>>, vector<1x16x64xf32>
      %61 = vector.shape_cast %60 : vector<1x16x64xf32> to vector<16x64xf32>
      %cst_24 = arith.constant dense<0.000000e+00> : vector<8x64xf32>
      %62 = tpu.matmul %arg13, %58, %cst_24 {dimension_numbers = #tpu.dot_dimension_numbers<[1], [0], [0], [1], [0, 0, 1, 1], [], []>} : vector<8x16xf32>, vector<16x64xf32>, vector<8x64xf32> -> vector<8x64xf32>
      %63 = arith.index_cast %arg12 : i32 to index
      %c0_25 = arith.constant 0 : index
      %c0_26 = arith.constant 0 : index
      %64 = vector.load %arg5[%63, %c0_25, %c0_26] : memref<16x1x64xf32, #tpu.memory_space<vmem>>, vector<1x1x64xf32>
      %65 = vector.shape_cast %64 : vector<1x1x64xf32> to vector<1x64xf32>
      %66 = vector.broadcast %65 : vector<1x64xf32> to vector<8x64xf32>
      %67 = arith.addf %62, %66 : vector<8x64xf32>
      %68 = arith.index_cast %arg12 : i32 to index
      %c0_27 = arith.constant 0 : index
      %c0_28 = arith.constant 0 : index
      %69 = vector.load %arg6[%68, %c0_27, %c0_28] : memref<16x1x16xf32, #tpu.memory_space<vmem>>, vector<1x1x16xf32>
      %70 = vector.shape_cast %69 : vector<1x1x16xf32> to vector<1x16xf32>
      %71 = arith.index_cast %arg12 : i32 to index
      %c0_29 = arith.constant 0 : index
      %c0_30 = arith.constant 0 : index
      %72 = vector.load %arg7[%71, %c0_29, %c0_30] : memref<16x1x16xf32, #tpu.memory_space<vmem>>, vector<1x1x16xf32>
      %73 = vector.shape_cast %72 : vector<1x1x16xf32> to vector<1x16xf32>
      %cst_31 = arith.constant 0.000000e+00 : f32
      %74 = vector.broadcast %cst_31 : f32 to vector<8x16xf32>
      %75 = vector.extract_strided_slice %67 {offsets = [0, 0], sizes = [1, 64], strides = [1, 1]} : vector<8x64xf32> to vector<1x64xf32>
      %cst_32 = arith.constant dense<0.000000e+00> : vector<1x64xf32>
      %76 = tpu.matmul %70, %61, %cst_32 {dimension_numbers = #tpu.dot_dimension_numbers<[1], [0], [0], [1], [0, 0, 1, 1], [], []>} : vector<1x16xf32>, vector<16x64xf32>, vector<1x64xf32> -> vector<1x64xf32>
      %77 = arith.addf %75, %76 : vector<1x64xf32>
      %78 = vector.extract_strided_slice %77 {offsets = [0, 0], sizes = [1, 16], strides = [1, 1]} : vector<1x64xf32> to vector<1x16xf32>
      %cst_33 = arith.constant 0.000000e+00 : f32
      %79 = vector.broadcast %cst_33 : f32 to vector<1x16xf32>
      %80 = arith.subf %79, %78 : vector<1x16xf32>
      %81 = math.exp %80 : vector<1x16xf32>
      %cst_34 = arith.constant 1.000000e+00 : f32
      %82 = vector.broadcast %cst_34 : f32 to vector<1x16xf32>
      %83 = arith.addf %82, %81 : vector<1x16xf32>
      %cst_35 = arith.constant 1.000000e+00 : f32
      %84 = vector.broadcast %cst_35 : f32 to vector<1x16xf32>
      %85 = arith.divf %84, %83 : vector<1x16xf32>
      %86 = vector.extract_strided_slice %77 {offsets = [0, 16], sizes = [1, 16], strides = [1, 1]} : vector<1x64xf32> to vector<1x16xf32>
      %cst_36 = arith.constant 0.000000e+00 : f32
      %87 = vector.broadcast %cst_36 : f32 to vector<1x16xf32>
      %88 = arith.subf %87, %86 : vector<1x16xf32>
      %89 = math.exp %88 : vector<1x16xf32>
      %cst_37 = arith.constant 1.000000e+00 : f32
      %90 = vector.broadcast %cst_37 : f32 to vector<1x16xf32>
      %91 = arith.addf %90, %89 : vector<1x16xf32>
      %cst_38 = arith.constant 1.000000e+00 : f32
      %92 = vector.broadcast %cst_38 : f32 to vector<1x16xf32>
      %93 = arith.divf %92, %91 : vector<1x16xf32>
      %94 = vector.extract_strided_slice %77 {offsets = [0, 32], sizes = [1, 16], strides = [1, 1]} : vector<1x64xf32> to vector<1x16xf32>
      %95 = math.tanh %94 : vector<1x16xf32>
      %96 = vector.extract_strided_slice %77 {offsets = [0, 48], sizes = [1, 16], strides = [1, 1]} : vector<1x64xf32> to vector<1x16xf32>
      %cst_39 = arith.constant 0.000000e+00 : f32
      %97 = vector.broadcast %cst_39 : f32 to vector<1x16xf32>
      %98 = arith.subf %97, %96 : vector<1x16xf32>
      %99 = math.exp %98 : vector<1x16xf32>
      %cst_40 = arith.constant 1.000000e+00 : f32
      %100 = vector.broadcast %cst_40 : f32 to vector<1x16xf32>
      %101 = arith.addf %100, %99 : vector<1x16xf32>
      %cst_41 = arith.constant 1.000000e+00 : f32
      %102 = vector.broadcast %cst_41 : f32 to vector<1x16xf32>
      %103 = arith.divf %102, %101 : vector<1x16xf32>
      %104 = arith.mulf %93, %73 : vector<1x16xf32>
      %105 = arith.mulf %85, %95 : vector<1x16xf32>
      %106 = arith.addf %104, %105 : vector<1x16xf32>
      %107 = math.tanh %106 : vector<1x16xf32>
      %108 = arith.mulf %103, %107 : vector<1x16xf32>
      %c0_i32_42 = arith.constant 0 : i32
      %109 = vector.broadcast %c0_i32_42 : i32 to vector<8x16xi32>
      %110 = arith.cmpi eq, %47, %109 : vector<8x16xi32>
      %111 = vector.shape_cast %108 : vector<1x16xf32> to vector<1x16xf32>
      %112 = vector.broadcast %111 : vector<1x16xf32> to vector<8x16xf32>
      %113 = arith.select %110, %112, %74 : vector<8x16xi1>, vector<8x16xf32>
      %114 = vector.extract_strided_slice %67 {offsets = [1, 0], sizes = [1, 64], strides = [1, 1]} : vector<8x64xf32> to vector<1x64xf32>
      %cst_43 = arith.constant dense<0.000000e+00> : vector<1x64xf32>
      %115 = tpu.matmul %108, %61, %cst_43 {dimension_numbers = #tpu.dot_dimension_numbers<[1], [0], [0], [1], [0, 0, 1, 1], [], []>} : vector<1x16xf32>, vector<16x64xf32>, vector<1x64xf32> -> vector<1x64xf32>
      %116 = arith.addf %114, %115 : vector<1x64xf32>
      %117 = vector.extract_strided_slice %116 {offsets = [0, 0], sizes = [1, 16], strides = [1, 1]} : vector<1x64xf32> to vector<1x16xf32>
      %cst_44 = arith.constant 0.000000e+00 : f32
      %118 = vector.broadcast %cst_44 : f32 to vector<1x16xf32>
      %119 = arith.subf %118, %117 : vector<1x16xf32>
      %120 = math.exp %119 : vector<1x16xf32>
      %cst_45 = arith.constant 1.000000e+00 : f32
      %121 = vector.broadcast %cst_45 : f32 to vector<1x16xf32>
      %122 = arith.addf %121, %120 : vector<1x16xf32>
      %cst_46 = arith.constant 1.000000e+00 : f32
      %123 = vector.broadcast %cst_46 : f32 to vector<1x16xf32>
      %124 = arith.divf %123, %122 : vector<1x16xf32>
      %125 = vector.extract_strided_slice %116 {offsets = [0, 16], sizes = [1, 16], strides = [1, 1]} : vector<1x64xf32> to vector<1x16xf32>
      %cst_47 = arith.constant 0.000000e+00 : f32
      %126 = vector.broadcast %cst_47 : f32 to vector<1x16xf32>
      %127 = arith.subf %126, %125 : vector<1x16xf32>
      %128 = math.exp %127 : vector<1x16xf32>
      %cst_48 = arith.constant 1.000000e+00 : f32
      %129 = vector.broadcast %cst_48 : f32 to vector<1x16xf32>
      %130 = arith.addf %129, %128 : vector<1x16xf32>
      %cst_49 = arith.constant 1.000000e+00 : f32
      %131 = vector.broadcast %cst_49 : f32 to vector<1x16xf32>
      %132 = arith.divf %131, %130 : vector<1x16xf32>
      %133 = vector.extract_strided_slice %116 {offsets = [0, 32], sizes = [1, 16], strides = [1, 1]} : vector<1x64xf32> to vector<1x16xf32>
      %134 = math.tanh %133 : vector<1x16xf32>
      %135 = vector.extract_strided_slice %116 {offsets = [0, 48], sizes = [1, 16], strides = [1, 1]} : vector<1x64xf32> to vector<1x16xf32>
      %cst_50 = arith.constant 0.000000e+00 : f32
      %136 = vector.broadcast %cst_50 : f32 to vector<1x16xf32>
      %137 = arith.subf %136, %135 : vector<1x16xf32>
      %138 = math.exp %137 : vector<1x16xf32>
      %cst_51 = arith.constant 1.000000e+00 : f32
      %139 = vector.broadcast %cst_51 : f32 to vector<1x16xf32>
      %140 = arith.addf %139, %138 : vector<1x16xf32>
      %cst_52 = arith.constant 1.000000e+00 : f32
      %141 = vector.broadcast %cst_52 : f32 to vector<1x16xf32>
      %142 = arith.divf %141, %140 : vector<1x16xf32>
      %143 = arith.mulf %132, %106 : vector<1x16xf32>
      %144 = arith.mulf %124, %134 : vector<1x16xf32>
      %145 = arith.addf %143, %144 : vector<1x16xf32>
      %146 = math.tanh %145 : vector<1x16xf32>
      %147 = arith.mulf %142, %146 : vector<1x16xf32>
      %c1_i32_53 = arith.constant 1 : i32
      %148 = vector.broadcast %c1_i32_53 : i32 to vector<8x16xi32>
      %149 = arith.cmpi eq, %47, %148 : vector<8x16xi32>
      %150 = vector.shape_cast %147 : vector<1x16xf32> to vector<1x16xf32>
      %151 = vector.broadcast %150 : vector<1x16xf32> to vector<8x16xf32>
      %152 = arith.select %149, %151, %113 : vector<8x16xi1>, vector<8x16xf32>
      %153 = vector.extract_strided_slice %67 {offsets = [2, 0], sizes = [1, 64], strides = [1, 1]} : vector<8x64xf32> to vector<1x64xf32>
      %cst_54 = arith.constant dense<0.000000e+00> : vector<1x64xf32>
      %154 = tpu.matmul %147, %61, %cst_54 {dimension_numbers = #tpu.dot_dimension_numbers<[1], [0], [0], [1], [0, 0, 1, 1], [], []>} : vector<1x16xf32>, vector<16x64xf32>, vector<1x64xf32> -> vector<1x64xf32>
      %155 = arith.addf %153, %154 : vector<1x64xf32>
      %156 = vector.extract_strided_slice %155 {offsets = [0, 0], sizes = [1, 16], strides = [1, 1]} : vector<1x64xf32> to vector<1x16xf32>
      %cst_55 = arith.constant 0.000000e+00 : f32
      %157 = vector.broadcast %cst_55 : f32 to vector<1x16xf32>
      %158 = arith.subf %157, %156 : vector<1x16xf32>
      %159 = math.exp %158 : vector<1x16xf32>
      %cst_56 = arith.constant 1.000000e+00 : f32
      %160 = vector.broadcast %cst_56 : f32 to vector<1x16xf32>
      %161 = arith.addf %160, %159 : vector<1x16xf32>
      %cst_57 = arith.constant 1.000000e+00 : f32
      %162 = vector.broadcast %cst_57 : f32 to vector<1x16xf32>
      %163 = arith.divf %162, %161 : vector<1x16xf32>
      %164 = vector.extract_strided_slice %155 {offsets = [0, 16], sizes = [1, 16], strides = [1, 1]} : vector<1x64xf32> to vector<1x16xf32>
      %cst_58 = arith.constant 0.000000e+00 : f32
      %165 = vector.broadcast %cst_58 : f32 to vector<1x16xf32>
      %166 = arith.subf %165, %164 : vector<1x16xf32>
      %167 = math.exp %166 : vector<1x16xf32>
      %cst_59 = arith.constant 1.000000e+00 : f32
      %168 = vector.broadcast %cst_59 : f32 to vector<1x16xf32>
      %169 = arith.addf %168, %167 : vector<1x16xf32>
      %cst_60 = arith.constant 1.000000e+00 : f32
      %170 = vector.broadcast %cst_60 : f32 to vector<1x16xf32>
      %171 = arith.divf %170, %169 : vector<1x16xf32>
      %172 = vector.extract_strided_slice %155 {offsets = [0, 32], sizes = [1, 16], strides = [1, 1]} : vector<1x64xf32> to vector<1x16xf32>
      %173 = math.tanh %172 : vector<1x16xf32>
      %174 = vector.extract_strided_slice %155 {offsets = [0, 48], sizes = [1, 16], strides = [1, 1]} : vector<1x64xf32> to vector<1x16xf32>
      %cst_61 = arith.constant 0.000000e+00 : f32
      %175 = vector.broadcast %cst_61 : f32 to vector<1x16xf32>
      %176 = arith.subf %175, %174 : vector<1x16xf32>
      %177 = math.exp %176 : vector<1x16xf32>
      %cst_62 = arith.constant 1.000000e+00 : f32
      %178 = vector.broadcast %cst_62 : f32 to vector<1x16xf32>
      %179 = arith.addf %178, %177 : vector<1x16xf32>
      %cst_63 = arith.constant 1.000000e+00 : f32
      %180 = vector.broadcast %cst_63 : f32 to vector<1x16xf32>
      %181 = arith.divf %180, %179 : vector<1x16xf32>
      %182 = arith.mulf %171, %145 : vector<1x16xf32>
      %183 = arith.mulf %163, %173 : vector<1x16xf32>
      %184 = arith.addf %182, %183 : vector<1x16xf32>
      %185 = math.tanh %184 : vector<1x16xf32>
      %186 = arith.mulf %181, %185 : vector<1x16xf32>
      %c2_i32 = arith.constant 2 : i32
      %187 = vector.broadcast %c2_i32 : i32 to vector<8x16xi32>
      %188 = arith.cmpi eq, %47, %187 : vector<8x16xi32>
      %189 = vector.shape_cast %186 : vector<1x16xf32> to vector<1x16xf32>
      %190 = vector.broadcast %189 : vector<1x16xf32> to vector<8x16xf32>
      %191 = arith.select %188, %190, %152 : vector<8x16xi1>, vector<8x16xf32>
      %192 = vector.extract_strided_slice %67 {offsets = [3, 0], sizes = [1, 64], strides = [1, 1]} : vector<8x64xf32> to vector<1x64xf32>
      %cst_64 = arith.constant dense<0.000000e+00> : vector<1x64xf32>
      %193 = tpu.matmul %186, %61, %cst_64 {dimension_numbers = #tpu.dot_dimension_numbers<[1], [0], [0], [1], [0, 0, 1, 1], [], []>} : vector<1x16xf32>, vector<16x64xf32>, vector<1x64xf32> -> vector<1x64xf32>
      %194 = arith.addf %192, %193 : vector<1x64xf32>
      %195 = vector.extract_strided_slice %194 {offsets = [0, 0], sizes = [1, 16], strides = [1, 1]} : vector<1x64xf32> to vector<1x16xf32>
      %cst_65 = arith.constant 0.000000e+00 : f32
      %196 = vector.broadcast %cst_65 : f32 to vector<1x16xf32>
      %197 = arith.subf %196, %195 : vector<1x16xf32>
      %198 = math.exp %197 : vector<1x16xf32>
      %cst_66 = arith.constant 1.000000e+00 : f32
      %199 = vector.broadcast %cst_66 : f32 to vector<1x16xf32>
      %200 = arith.addf %199, %198 : vector<1x16xf32>
      %cst_67 = arith.constant 1.000000e+00 : f32
      %201 = vector.broadcast %cst_67 : f32 to vector<1x16xf32>
      %202 = arith.divf %201, %200 : vector<1x16xf32>
      %203 = vector.extract_strided_slice %194 {offsets = [0, 16], sizes = [1, 16], strides = [1, 1]} : vector<1x64xf32> to vector<1x16xf32>
      %cst_68 = arith.constant 0.000000e+00 : f32
      %204 = vector.broadcast %cst_68 : f32 to vector<1x16xf32>
      %205 = arith.subf %204, %203 : vector<1x16xf32>
      %206 = math.exp %205 : vector<1x16xf32>
      %cst_69 = arith.constant 1.000000e+00 : f32
      %207 = vector.broadcast %cst_69 : f32 to vector<1x16xf32>
      %208 = arith.addf %207, %206 : vector<1x16xf32>
      %cst_70 = arith.constant 1.000000e+00 : f32
      %209 = vector.broadcast %cst_70 : f32 to vector<1x16xf32>
      %210 = arith.divf %209, %208 : vector<1x16xf32>
      %211 = vector.extract_strided_slice %194 {offsets = [0, 32], sizes = [1, 16], strides = [1, 1]} : vector<1x64xf32> to vector<1x16xf32>
      %212 = math.tanh %211 : vector<1x16xf32>
      %213 = vector.extract_strided_slice %194 {offsets = [0, 48], sizes = [1, 16], strides = [1, 1]} : vector<1x64xf32> to vector<1x16xf32>
      %cst_71 = arith.constant 0.000000e+00 : f32
      %214 = vector.broadcast %cst_71 : f32 to vector<1x16xf32>
      %215 = arith.subf %214, %213 : vector<1x16xf32>
      %216 = math.exp %215 : vector<1x16xf32>
      %cst_72 = arith.constant 1.000000e+00 : f32
      %217 = vector.broadcast %cst_72 : f32 to vector<1x16xf32>
      %218 = arith.addf %217, %216 : vector<1x16xf32>
      %cst_73 = arith.constant 1.000000e+00 : f32
      %219 = vector.broadcast %cst_73 : f32 to vector<1x16xf32>
      %220 = arith.divf %219, %218 : vector<1x16xf32>
      %221 = arith.mulf %210, %184 : vector<1x16xf32>
      %222 = arith.mulf %202, %212 : vector<1x16xf32>
      %223 = arith.addf %221, %222 : vector<1x16xf32>
      %224 = math.tanh %223 : vector<1x16xf32>
      %225 = arith.mulf %220, %224 : vector<1x16xf32>
      %c3_i32 = arith.constant 3 : i32
      %226 = vector.broadcast %c3_i32 : i32 to vector<8x16xi32>
      %227 = arith.cmpi eq, %47, %226 : vector<8x16xi32>
      %228 = vector.shape_cast %225 : vector<1x16xf32> to vector<1x16xf32>
      %229 = vector.broadcast %228 : vector<1x16xf32> to vector<8x16xf32>
      %230 = arith.select %227, %229, %191 : vector<8x16xi1>, vector<8x16xf32>
      %231 = vector.extract_strided_slice %67 {offsets = [4, 0], sizes = [1, 64], strides = [1, 1]} : vector<8x64xf32> to vector<1x64xf32>
      %cst_74 = arith.constant dense<0.000000e+00> : vector<1x64xf32>
      %232 = tpu.matmul %225, %61, %cst_74 {dimension_numbers = #tpu.dot_dimension_numbers<[1], [0], [0], [1], [0, 0, 1, 1], [], []>} : vector<1x16xf32>, vector<16x64xf32>, vector<1x64xf32> -> vector<1x64xf32>
      %233 = arith.addf %231, %232 : vector<1x64xf32>
      %234 = vector.extract_strided_slice %233 {offsets = [0, 0], sizes = [1, 16], strides = [1, 1]} : vector<1x64xf32> to vector<1x16xf32>
      %cst_75 = arith.constant 0.000000e+00 : f32
      %235 = vector.broadcast %cst_75 : f32 to vector<1x16xf32>
      %236 = arith.subf %235, %234 : vector<1x16xf32>
      %237 = math.exp %236 : vector<1x16xf32>
      %cst_76 = arith.constant 1.000000e+00 : f32
      %238 = vector.broadcast %cst_76 : f32 to vector<1x16xf32>
      %239 = arith.addf %238, %237 : vector<1x16xf32>
      %cst_77 = arith.constant 1.000000e+00 : f32
      %240 = vector.broadcast %cst_77 : f32 to vector<1x16xf32>
      %241 = arith.divf %240, %239 : vector<1x16xf32>
      %242 = vector.extract_strided_slice %233 {offsets = [0, 16], sizes = [1, 16], strides = [1, 1]} : vector<1x64xf32> to vector<1x16xf32>
      %cst_78 = arith.constant 0.000000e+00 : f32
      %243 = vector.broadcast %cst_78 : f32 to vector<1x16xf32>
      %244 = arith.subf %243, %242 : vector<1x16xf32>
      %245 = math.exp %244 : vector<1x16xf32>
      %cst_79 = arith.constant 1.000000e+00 : f32
      %246 = vector.broadcast %cst_79 : f32 to vector<1x16xf32>
      %247 = arith.addf %246, %245 : vector<1x16xf32>
      %cst_80 = arith.constant 1.000000e+00 : f32
      %248 = vector.broadcast %cst_80 : f32 to vector<1x16xf32>
      %249 = arith.divf %248, %247 : vector<1x16xf32>
      %250 = vector.extract_strided_slice %233 {offsets = [0, 32], sizes = [1, 16], strides = [1, 1]} : vector<1x64xf32> to vector<1x16xf32>
      %251 = math.tanh %250 : vector<1x16xf32>
      %252 = vector.extract_strided_slice %233 {offsets = [0, 48], sizes = [1, 16], strides = [1, 1]} : vector<1x64xf32> to vector<1x16xf32>
      %cst_81 = arith.constant 0.000000e+00 : f32
      %253 = vector.broadcast %cst_81 : f32 to vector<1x16xf32>
      %254 = arith.subf %253, %252 : vector<1x16xf32>
      %255 = math.exp %254 : vector<1x16xf32>
      %cst_82 = arith.constant 1.000000e+00 : f32
      %256 = vector.broadcast %cst_82 : f32 to vector<1x16xf32>
      %257 = arith.addf %256, %255 : vector<1x16xf32>
      %cst_83 = arith.constant 1.000000e+00 : f32
      %258 = vector.broadcast %cst_83 : f32 to vector<1x16xf32>
      %259 = arith.divf %258, %257 : vector<1x16xf32>
      %260 = arith.mulf %249, %223 : vector<1x16xf32>
      %261 = arith.mulf %241, %251 : vector<1x16xf32>
      %262 = arith.addf %260, %261 : vector<1x16xf32>
      %263 = math.tanh %262 : vector<1x16xf32>
      %264 = arith.mulf %259, %263 : vector<1x16xf32>
      %c4_i32 = arith.constant 4 : i32
      %265 = vector.broadcast %c4_i32 : i32 to vector<8x16xi32>
      %266 = arith.cmpi eq, %47, %265 : vector<8x16xi32>
      %267 = vector.shape_cast %264 : vector<1x16xf32> to vector<1x16xf32>
      %268 = vector.broadcast %267 : vector<1x16xf32> to vector<8x16xf32>
      %269 = arith.select %266, %268, %230 : vector<8x16xi1>, vector<8x16xf32>
      %270 = vector.extract_strided_slice %67 {offsets = [5, 0], sizes = [1, 64], strides = [1, 1]} : vector<8x64xf32> to vector<1x64xf32>
      %cst_84 = arith.constant dense<0.000000e+00> : vector<1x64xf32>
      %271 = tpu.matmul %264, %61, %cst_84 {dimension_numbers = #tpu.dot_dimension_numbers<[1], [0], [0], [1], [0, 0, 1, 1], [], []>} : vector<1x16xf32>, vector<16x64xf32>, vector<1x64xf32> -> vector<1x64xf32>
      %272 = arith.addf %270, %271 : vector<1x64xf32>
      %273 = vector.extract_strided_slice %272 {offsets = [0, 0], sizes = [1, 16], strides = [1, 1]} : vector<1x64xf32> to vector<1x16xf32>
      %cst_85 = arith.constant 0.000000e+00 : f32
      %274 = vector.broadcast %cst_85 : f32 to vector<1x16xf32>
      %275 = arith.subf %274, %273 : vector<1x16xf32>
      %276 = math.exp %275 : vector<1x16xf32>
      %cst_86 = arith.constant 1.000000e+00 : f32
      %277 = vector.broadcast %cst_86 : f32 to vector<1x16xf32>
      %278 = arith.addf %277, %276 : vector<1x16xf32>
      %cst_87 = arith.constant 1.000000e+00 : f32
      %279 = vector.broadcast %cst_87 : f32 to vector<1x16xf32>
      %280 = arith.divf %279, %278 : vector<1x16xf32>
      %281 = vector.extract_strided_slice %272 {offsets = [0, 16], sizes = [1, 16], strides = [1, 1]} : vector<1x64xf32> to vector<1x16xf32>
      %cst_88 = arith.constant 0.000000e+00 : f32
      %282 = vector.broadcast %cst_88 : f32 to vector<1x16xf32>
      %283 = arith.subf %282, %281 : vector<1x16xf32>
      %284 = math.exp %283 : vector<1x16xf32>
      %cst_89 = arith.constant 1.000000e+00 : f32
      %285 = vector.broadcast %cst_89 : f32 to vector<1x16xf32>
      %286 = arith.addf %285, %284 : vector<1x16xf32>
      %cst_90 = arith.constant 1.000000e+00 : f32
      %287 = vector.broadcast %cst_90 : f32 to vector<1x16xf32>
      %288 = arith.divf %287, %286 : vector<1x16xf32>
      %289 = vector.extract_strided_slice %272 {offsets = [0, 32], sizes = [1, 16], strides = [1, 1]} : vector<1x64xf32> to vector<1x16xf32>
      %290 = math.tanh %289 : vector<1x16xf32>
      %291 = vector.extract_strided_slice %272 {offsets = [0, 48], sizes = [1, 16], strides = [1, 1]} : vector<1x64xf32> to vector<1x16xf32>
      %cst_91 = arith.constant 0.000000e+00 : f32
      %292 = vector.broadcast %cst_91 : f32 to vector<1x16xf32>
      %293 = arith.subf %292, %291 : vector<1x16xf32>
      %294 = math.exp %293 : vector<1x16xf32>
      %cst_92 = arith.constant 1.000000e+00 : f32
      %295 = vector.broadcast %cst_92 : f32 to vector<1x16xf32>
      %296 = arith.addf %295, %294 : vector<1x16xf32>
      %cst_93 = arith.constant 1.000000e+00 : f32
      %297 = vector.broadcast %cst_93 : f32 to vector<1x16xf32>
      %298 = arith.divf %297, %296 : vector<1x16xf32>
      %299 = arith.mulf %288, %262 : vector<1x16xf32>
      %300 = arith.mulf %280, %290 : vector<1x16xf32>
      %301 = arith.addf %299, %300 : vector<1x16xf32>
      %302 = math.tanh %301 : vector<1x16xf32>
      %303 = arith.mulf %298, %302 : vector<1x16xf32>
      %c5_i32 = arith.constant 5 : i32
      %304 = vector.broadcast %c5_i32 : i32 to vector<8x16xi32>
      %305 = arith.cmpi eq, %47, %304 : vector<8x16xi32>
      %306 = vector.shape_cast %303 : vector<1x16xf32> to vector<1x16xf32>
      %307 = vector.broadcast %306 : vector<1x16xf32> to vector<8x16xf32>
      %308 = arith.select %305, %307, %269 : vector<8x16xi1>, vector<8x16xf32>
      %309 = vector.extract_strided_slice %67 {offsets = [6, 0], sizes = [1, 64], strides = [1, 1]} : vector<8x64xf32> to vector<1x64xf32>
      %cst_94 = arith.constant dense<0.000000e+00> : vector<1x64xf32>
      %310 = tpu.matmul %303, %61, %cst_94 {dimension_numbers = #tpu.dot_dimension_numbers<[1], [0], [0], [1], [0, 0, 1, 1], [], []>} : vector<1x16xf32>, vector<16x64xf32>, vector<1x64xf32> -> vector<1x64xf32>
      %311 = arith.addf %309, %310 : vector<1x64xf32>
      %312 = vector.extract_strided_slice %311 {offsets = [0, 0], sizes = [1, 16], strides = [1, 1]} : vector<1x64xf32> to vector<1x16xf32>
      %cst_95 = arith.constant 0.000000e+00 : f32
      %313 = vector.broadcast %cst_95 : f32 to vector<1x16xf32>
      %314 = arith.subf %313, %312 : vector<1x16xf32>
      %315 = math.exp %314 : vector<1x16xf32>
      %cst_96 = arith.constant 1.000000e+00 : f32
      %316 = vector.broadcast %cst_96 : f32 to vector<1x16xf32>
      %317 = arith.addf %316, %315 : vector<1x16xf32>
      %cst_97 = arith.constant 1.000000e+00 : f32
      %318 = vector.broadcast %cst_97 : f32 to vector<1x16xf32>
      %319 = arith.divf %318, %317 : vector<1x16xf32>
      %320 = vector.extract_strided_slice %311 {offsets = [0, 16], sizes = [1, 16], strides = [1, 1]} : vector<1x64xf32> to vector<1x16xf32>
      %cst_98 = arith.constant 0.000000e+00 : f32
      %321 = vector.broadcast %cst_98 : f32 to vector<1x16xf32>
      %322 = arith.subf %321, %320 : vector<1x16xf32>
      %323 = math.exp %322 : vector<1x16xf32>
      %cst_99 = arith.constant 1.000000e+00 : f32
      %324 = vector.broadcast %cst_99 : f32 to vector<1x16xf32>
      %325 = arith.addf %324, %323 : vector<1x16xf32>
      %cst_100 = arith.constant 1.000000e+00 : f32
      %326 = vector.broadcast %cst_100 : f32 to vector<1x16xf32>
      %327 = arith.divf %326, %325 : vector<1x16xf32>
      %328 = vector.extract_strided_slice %311 {offsets = [0, 32], sizes = [1, 16], strides = [1, 1]} : vector<1x64xf32> to vector<1x16xf32>
      %329 = math.tanh %328 : vector<1x16xf32>
      %330 = vector.extract_strided_slice %311 {offsets = [0, 48], sizes = [1, 16], strides = [1, 1]} : vector<1x64xf32> to vector<1x16xf32>
      %cst_101 = arith.constant 0.000000e+00 : f32
      %331 = vector.broadcast %cst_101 : f32 to vector<1x16xf32>
      %332 = arith.subf %331, %330 : vector<1x16xf32>
      %333 = math.exp %332 : vector<1x16xf32>
      %cst_102 = arith.constant 1.000000e+00 : f32
      %334 = vector.broadcast %cst_102 : f32 to vector<1x16xf32>
      %335 = arith.addf %334, %333 : vector<1x16xf32>
      %cst_103 = arith.constant 1.000000e+00 : f32
      %336 = vector.broadcast %cst_103 : f32 to vector<1x16xf32>
      %337 = arith.divf %336, %335 : vector<1x16xf32>
      %338 = arith.mulf %327, %301 : vector<1x16xf32>
      %339 = arith.mulf %319, %329 : vector<1x16xf32>
      %340 = arith.addf %338, %339 : vector<1x16xf32>
      %341 = math.tanh %340 : vector<1x16xf32>
      %342 = arith.mulf %337, %341 : vector<1x16xf32>
      %c6_i32 = arith.constant 6 : i32
      %343 = vector.broadcast %c6_i32 : i32 to vector<8x16xi32>
      %344 = arith.cmpi eq, %47, %343 : vector<8x16xi32>
      %345 = vector.shape_cast %342 : vector<1x16xf32> to vector<1x16xf32>
      %346 = vector.broadcast %345 : vector<1x16xf32> to vector<8x16xf32>
      %347 = arith.select %344, %346, %308 : vector<8x16xi1>, vector<8x16xf32>
      %348 = vector.extract_strided_slice %67 {offsets = [7, 0], sizes = [1, 64], strides = [1, 1]} : vector<8x64xf32> to vector<1x64xf32>
      %cst_104 = arith.constant dense<0.000000e+00> : vector<1x64xf32>
      %349 = tpu.matmul %342, %61, %cst_104 {dimension_numbers = #tpu.dot_dimension_numbers<[1], [0], [0], [1], [0, 0, 1, 1], [], []>} : vector<1x16xf32>, vector<16x64xf32>, vector<1x64xf32> -> vector<1x64xf32>
      %350 = arith.addf %348, %349 : vector<1x64xf32>
      %351 = vector.extract_strided_slice %350 {offsets = [0, 0], sizes = [1, 16], strides = [1, 1]} : vector<1x64xf32> to vector<1x16xf32>
      %cst_105 = arith.constant 0.000000e+00 : f32
      %352 = vector.broadcast %cst_105 : f32 to vector<1x16xf32>
      %353 = arith.subf %352, %351 : vector<1x16xf32>
      %354 = math.exp %353 : vector<1x16xf32>
      %cst_106 = arith.constant 1.000000e+00 : f32
      %355 = vector.broadcast %cst_106 : f32 to vector<1x16xf32>
      %356 = arith.addf %355, %354 : vector<1x16xf32>
      %cst_107 = arith.constant 1.000000e+00 : f32
      %357 = vector.broadcast %cst_107 : f32 to vector<1x16xf32>
      %358 = arith.divf %357, %356 : vector<1x16xf32>
      %359 = vector.extract_strided_slice %350 {offsets = [0, 16], sizes = [1, 16], strides = [1, 1]} : vector<1x64xf32> to vector<1x16xf32>
      %cst_108 = arith.constant 0.000000e+00 : f32
      %360 = vector.broadcast %cst_108 : f32 to vector<1x16xf32>
      %361 = arith.subf %360, %359 : vector<1x16xf32>
      %362 = math.exp %361 : vector<1x16xf32>
      %cst_109 = arith.constant 1.000000e+00 : f32
      %363 = vector.broadcast %cst_109 : f32 to vector<1x16xf32>
      %364 = arith.addf %363, %362 : vector<1x16xf32>
      %cst_110 = arith.constant 1.000000e+00 : f32
      %365 = vector.broadcast %cst_110 : f32 to vector<1x16xf32>
      %366 = arith.divf %365, %364 : vector<1x16xf32>
      %367 = vector.extract_strided_slice %350 {offsets = [0, 32], sizes = [1, 16], strides = [1, 1]} : vector<1x64xf32> to vector<1x16xf32>
      %368 = math.tanh %367 : vector<1x16xf32>
      %369 = vector.extract_strided_slice %350 {offsets = [0, 48], sizes = [1, 16], strides = [1, 1]} : vector<1x64xf32> to vector<1x16xf32>
      %cst_111 = arith.constant 0.000000e+00 : f32
      %370 = vector.broadcast %cst_111 : f32 to vector<1x16xf32>
      %371 = arith.subf %370, %369 : vector<1x16xf32>
      %372 = math.exp %371 : vector<1x16xf32>
      %cst_112 = arith.constant 1.000000e+00 : f32
      %373 = vector.broadcast %cst_112 : f32 to vector<1x16xf32>
      %374 = arith.addf %373, %372 : vector<1x16xf32>
      %cst_113 = arith.constant 1.000000e+00 : f32
      %375 = vector.broadcast %cst_113 : f32 to vector<1x16xf32>
      %376 = arith.divf %375, %374 : vector<1x16xf32>
      %377 = arith.mulf %366, %340 : vector<1x16xf32>
      %378 = arith.mulf %358, %368 : vector<1x16xf32>
      %379 = arith.addf %377, %378 : vector<1x16xf32>
      %380 = math.tanh %379 : vector<1x16xf32>
      %381 = arith.mulf %376, %380 : vector<1x16xf32>
      %c7_i32 = arith.constant 7 : i32
      %382 = vector.broadcast %c7_i32 : i32 to vector<8x16xi32>
      %383 = arith.cmpi eq, %47, %382 : vector<8x16xi32>
      %384 = vector.shape_cast %381 : vector<1x16xf32> to vector<1x16xf32>
      %385 = vector.broadcast %384 : vector<1x16xf32> to vector<8x16xf32>
      %386 = arith.select %383, %385, %347 : vector<8x16xi1>, vector<8x16xf32>
      scf.yield %386 : vector<8x16xf32>
    }
    %c16_i32_12 = arith.constant 16 : i32
    %c0_13 = arith.constant 0 : index
    %c0_14 = arith.constant 0 : index
    %50 = vector.load %arg8[%c0_13, %c0_14] : memref<16x16xf32, #tpu.memory_space<vmem>>, vector<16x16xf32>
    %cst_15 = arith.constant dense<0.000000e+00> : vector<8x16xf32>
    %51 = tpu.matmul %49, %50, %cst_15 {dimension_numbers = #tpu.dot_dimension_numbers<[1], [0], [0], [1], [0, 0, 1, 1], [], []>} : vector<8x16xf32>, vector<16x16xf32>, vector<8x16xf32> -> vector<8x16xf32>
    %c0_16 = arith.constant 0 : index
    %c0_17 = arith.constant 0 : index
    %52 = vector.load %arg9[%c0_16, %c0_17] : memref<1x16xf32, #tpu.memory_space<vmem>>, vector<1x16xf32>
    %53 = vector.broadcast %52 : vector<1x16xf32> to vector<8x16xf32>
    %54 = arith.addf %51, %53 : vector<8x16xf32>
    %c0_18 = arith.constant 0 : index
    %c0_19 = arith.constant 0 : index
    %55 = vector.load %arg10[%c0_18, %c0_19] : memref<8x16xf32, #tpu.memory_space<vmem>>, vector<8x16xf32>
    tpu.vector_store %arg10[%c0_18, %c0_19], %54 {strides = array<i32>} : memref<8x16xf32, #tpu.memory_space<vmem>>, vector<8x16xf32>,
    return
  }
}

</mosaic_0001>

<llo_original>
// kernel: tpu_custom_call.1
$region0: #{tpu_custom_call.1}
  #allocation0 [shape = 'u32[]', space=smem, size = 0x4, offset = 0x4, fixed_abs, tag = 'smem constant byte address 0x4 - core index']
  #allocation1 [shape = 'u32[72,128]{1,0:T(1,128)}', space=vmem, size = 0x9000, scoped, tag = 'internal scratch']
  #allocation2 [shape = 'f32[8,16]{1,0:T(8,128)}', space=vmem, size = 0x1000, scoped, tag = 'scratch operand']
  #allocation3 [shape = 'f32[1]{0:T(128)S(6)}', space=smem, size = 0x200, scoped, tag = 'scoped memory for tpu_custom_call.1']
  %s0 = inlined_call_operand.hbm [shape: f32[8,2,16], index: 0, kind: input, shape index: {}]
  %s1 = inlined_call_operand.vmem [shape: f32[6], index: 1, kind: input, shape index: {}]
  %s2 = inlined_call_operand.<no memory space> [shape: f32[1], index: 2, kind: input, shape index: {}]
  %s3 = inlined_call_operand.hbm [shape: f32[16,16,64], index: 3, kind: input, shape index: {}]
  %s4 = inlined_call_operand.hbm [shape: f32[16,16,64], index: 4, kind: input, shape index: {}]
  %s5 = inlined_call_operand.hbm [shape: f32[16,1,64], index: 5, kind: input, shape index: {}]
  %s6 = inlined_call_operand.hbm [shape: f32[16,1,16], index: 6, kind: input, shape index: {}]
  %s7 = inlined_call_operand.hbm [shape: f32[16,1,16], index: 7, kind: input, shape index: {}]
  %s8 = inlined_call_operand.hbm [shape: f32[16,16], index: 8, kind: input, shape index: {}]
  %s9 = inlined_call_operand.vmem [shape: f32[1,16], index: 9, kind: input, shape index: {}]
  %s10 = inlined_call_operand.hbm [shape: f32[8,16], index: 10, kind: output, shape index: {}]
  %s11 = sld [smem:[#allocation0]]
  $region89: #{tpu_custom_call.1} parent=0
    _
  %s13 = ssub.s32 1, %s11
  %s14 = scalar_select 0, %s13, %s11
  %15 = sst [smem:[#allocation3]] %s2
  $region1: #{tpu_custom_call.1} parent=0
    #allocation4 [shape = 'u8[8192]{0}', space=vmem, size = 0x2000, scoped, tag = 'input window, operand 0, single buffered']
    #allocation5 [shape = 's32[1]{0}', space=sflag, size = 0x4, scoped, tag = 'scoped memory for tpu_custom_call.1']
    #allocation6 [shape = 's32[1]{0}', space=sflag, size = 0x4, scoped, tag = 'scoped memory for tpu_custom_call.1']
    #allocation7 [shape = 's32[1]{0}', space=sflag, size = 0x4, scoped, tag = 'scoped memory for tpu_custom_call.1']
    #allocation8 [shape = 'u8[512]{0}', space=smem, size = 0x200, scoped, tag = 'input window, operand 1, single buffered']
    #allocation9 [shape = 'u8[131072]{0}', space=vmem, size = 0x20000, scoped, tag = 'input window, operand 3, single buffered']
    #allocation10 [shape = 's32[1]{0}', space=sflag, size = 0x4, scoped, tag = 'scoped memory for tpu_custom_call.1']
    #allocation11 [shape = 'u8[131072]{0}', space=vmem, size = 0x20000, scoped, tag = 'input window, operand 4, single buffered']
    #allocation12 [shape = 'u8[8192]{0}', space=vmem, size = 0x2000, scoped, tag = 'input window, operand 5, single buffered']
    #allocation13 [shape = 's32[1]{0}', space=sflag, size = 0x4, scoped, tag = 'scoped memory for tpu_custom_call.1']
    #allocation14 [shape = 'u8[8192]{0}', space=vmem, size = 0x2000, scoped, tag = 'input window, operand 6, single buffered']
    #allocation15 [shape = 'u8[8192]{0}', space=vmem, size = 0x2000, scoped, tag = 'input window, operand 7, single buffered']
    #allocation16 [shape = 's32[1]{0}', space=sflag, size = 0x4, scoped, tag = 'scoped memory for tpu_custom_call.1']
    #allocation17 [shape = 'u8[8192]{0}', space=vmem, size = 0x2000, scoped, tag = 'input window, operand 8, single buffered']
    #allocation18 [shape = 'u8[4096]{0}', space=vmem, size = 0x1000, scoped, tag = 'output window, operand 0, single buffered']
    %16 = vsyncpa [#allocation5], 0
    %17 = vsyncpa [#allocation7], 0
    %18 = vsyncpa [#allocation10], 0
    %19 = vsyncpa [#allocation13], 0
    %20 = vsyncpa [#allocation16], 0
    %21 = vsyncpa [#allocation6], 0
    // Predicated region
    $region2: #{tpu_custom_call.1} parent=1 // pred_check
      _
    $region3: #{tpu_custom_call.1} parent=1 // pred_check_branch
      %23 = sbr.rel (0) target = $region5
    $region4: #{tpu_custom_call.1} parent=1 // pred_region
      %25 = vsyncadd [#allocation5], 0
      %s26 = sshll.u32 %s0, 4
      %s27 = int_to_ptr.hbm [resolvable:$true] %s26
      %s28 = sshll.u32 [#allocation4], 4
      %s29 = int_to_ptr.vmem [resolvable:$true] %s28
      %34 = dma.hbm_to_vmem [thread:$0]  %s27, 256, %s29, [#allocation5], 32, 32, 2
    $region5: #{tpu_custom_call.1} parent=1 // pred_fallthru
      _
    // Predicated region
    $region6: #{tpu_custom_call.1} parent=1 // pred_check
      _
    $region7: #{tpu_custom_call.1} parent=1 // pred_check_branch
      %36 = sbr.rel (0) target = $region9
    $region8: #{tpu_custom_call.1} parent=1 // pred_region
      %38 = vsyncadd [#allocation7], 0
      %s40 = sshll.u32 %s1, 4
      %s41 = int_to_ptr.vmem [resolvable:$true] %s40
      %43 = dma.vmem_to_smem %s41, 16, [#allocation8], [#allocation7]
    $region9: #{tpu_custom_call.1} parent=1 // pred_fallthru
      _
    // Predicated region
    $region10: #{tpu_custom_call.1} parent=1 // pred_check
      _
    $region11: #{tpu_custom_call.1} parent=1 // pred_check_branch
      %45 = sbr.rel (0) target = $region13
    $region12: #{tpu_custom_call.1} parent=1 // pred_region
      _
    $region13: #{tpu_custom_call.1} parent=1 // pred_fallthru
      _
    // Predicated region
    $region14: #{tpu_custom_call.1} parent=1 // pred_check
      _
    $region15: #{tpu_custom_call.1} parent=1 // pred_check_branch
      %47 = sbr.rel (0) target = $region17
    $region16: #{tpu_custom_call.1} parent=1 // pred_region
      %49 = vsyncadd [#allocation10], 0
      %s50 = sshll.u32 %s3, 4
      %s51 = int_to_ptr.hbm [resolvable:$true] %s50
      %s52 = sshll.u32 [#allocation9], 4
      %s53 = int_to_ptr.vmem [resolvable:$true] %s52
      %58 = dma.hbm_to_vmem [thread:$0]  %s51, 4096, %s53, [#allocation10], 128, 128, 8
    $region17: #{tpu_custom_call.1} parent=1 // pred_fallthru
      _
    // Predicated region
    $region18: #{tpu_custom_call.1} parent=1 // pred_check
      _
    $region19: #{tpu_custom_call.1} parent=1 // pred_check_branch
      %60 = sbr.rel (0) target = $region21
    $region20: #{tpu_custom_call.1} parent=1 // pred_region
      %62 = vsyncadd [#allocation10], 0
      %s63 = sshll.u32 %s4, 4
      %s64 = int_to_ptr.hbm [resolvable:$true] %s63
      %s65 = sshll.u32 [#allocation11], 4
      %s66 = int_to_ptr.vmem [resolvable:$true] %s65
      %71 = dma.hbm_to_vmem [thread:$0]  %s64, 4096, %s66, [#allocation10], 128, 128, 8
    $region21: #{tpu_custom_call.1} parent=1 // pred_fallthru
      _
    // Predicated region
    $region22: #{tpu_custom_call.1} parent=1 // pred_check
      _
    $region23: #{tpu_custom_call.1} parent=1 // pred_check_branch
      %73 = sbr.rel (0) target = $region25
    $region24: #{tpu_custom_call.1} parent=1 // pred_region
      %75 = vsyncadd [#allocation13], 0
      %s76 = sshll.u32 %s5, 4
      %s77 = int_to_ptr.hbm [resolvable:$true] %s76
      %s78 = sshll.u32 [#allocation12], 4
      %s79 = int_to_ptr.vmem [resolvable:$true] %s78
      %84 = dma.hbm_to_vmem [thread:$0]  %s77, 256, %s79, [#allocation13], 16, 16, 1
    $region25: #{tpu_custom_call.1} parent=1 // pred_fallthru
      _
    // Predicated region
    $region26: #{tpu_custom_call.1} parent=1 // pred_check
      _
    $region27: #{tpu_custom_call.1} parent=1 // pred_check_branch
      %86 = sbr.rel (0) target = $region29
    $region28: #{tpu_custom_call.1} parent=1 // pred_region
      %88 = vsyncadd [#allocation13], 0
      %s89 = sshll.u32 %s6, 4
      %s90 = int_to_ptr.hbm [resolvable:$true] %s89
      %s91 = sshll.u32 [#allocation14], 4
      %s92 = int_to_ptr.vmem [resolvable:$true] %s91
      %97 = dma.hbm_to_vmem [thread:$0]  %s90, 256, %s92, [#allocation13], 16, 16, 1
    $region29: #{tpu_custom_call.1} parent=1 // pred_fallthru
      _
    // Predicated region
    $region30: #{tpu_custom_call.1} parent=1 // pred_check
      _
    $region31: #{tpu_custom_call.1} parent=1 // pred_check_branch
      %99 = sbr.rel (0) target = $region33
    $region32: #{tpu_custom_call.1} parent=1 // pred_region
      %101 = vsyncadd [#allocation16], 0
      %s102 = sshll.u32 %s7, 4
      %s103 = int_to_ptr.hbm [resolvable:$true] %s102
      %s104 = sshll.u32 [#allocation15], 4
      %s105 = int_to_ptr.vmem [resolvable:$true] %s104
      %110 = dma.hbm_to_vmem [thread:$0]  %s103, 256, %s105, [#allocation16], 16, 16, 1
    $region33: #{tpu_custom_call.1} parent=1 // pred_fallthru
      _
    // Predicated region
    $region34: #{tpu_custom_call.1} parent=1 // pred_check
      _
    $region35: #{tpu_custom_call.1} parent=1 // pred_check_branch
      %112 = sbr.rel (0) target = $region37
    $region36: #{tpu_custom_call.1} parent=1 // pred_region
      %114 = vsyncadd [#allocation16], 0
      %s115 = sshll.u32 %s8, 4
      %s116 = int_to_ptr.hbm [resolvable:$true] %s115
      %s117 = sshll.u32 [#allocation17], 4
      %s118 = int_to_ptr.vmem [resolvable:$true] %s117
      %123 = dma.hbm_to_vmem [thread:$0]  %s116, 256, %s118, [#allocation16], 128, 128, 8
    $region37: #{tpu_custom_call.1} parent=1 // pred_fallthru
      _
    // Predicated region
    $region38: #{tpu_custom_call.1} parent=1 // pred_check
      _
    $region39: #{tpu_custom_call.1} parent=1 // pred_check_branch
      %125 = sbr.rel (0) target = $region41
    $region40: #{tpu_custom_call.1} parent=1 // pred_region
      _
    $region41: #{tpu_custom_call.1} parent=1 // pred_fallthru
      _
    // Predicated region
    $region42: #{tpu_custom_call.1} parent=1 // pred_check
      _
    $region43: #{tpu_custom_call.1} parent=1 // pred_check_branch
      %127 = sbr.rel (0) target = $region45
    $region44: #{tpu_custom_call.1} parent=1 // pred_region
      %129 = dma.done [#allocation5], 256
    $region45: #{tpu_custom_call.1} parent=1 // pred_fallthru
      _
    // Predicated region
    $region46: #{tpu_custom_call.1} parent=1 // pred_check
      _
    $region47: #{tpu_custom_call.1} parent=1 // pred_check_branch
      %131 = sbr.rel (0) target = $region49
    $region48: #{tpu_custom_call.1} parent=1 // pred_region
      %133 = dma.done [#allocation7], 16
    $region49: #{tpu_custom_call.1} parent=1 // pred_fallthru
      _
    // Predicated region
    $region50: #{tpu_custom_call.1} parent=1 // pred_check
      _
    $region51: #{tpu_custom_call.1} parent=1 // pred_check_branch
      %135 = sbr.rel (0) target = $region53
    $region52: #{tpu_custom_call.1} parent=1 // pred_region
      %137 = dma.done [#allocation10], 4096
    $region53: #{tpu_custom_call.1} parent=1 // pred_fallthru
      _
    // Predicated region
    $region54: #{tpu_custom_call.1} parent=1 // pred_check
      _
    $region55: #{tpu_custom_call.1} parent=1 // pred_check_branch
      %139 = sbr.rel (0) target = $region57
    $region56: #{tpu_custom_call.1} parent=1 // pred_region
      %141 = dma.done [#allocation10], 4096
    $region57: #{tpu_custom_call.1} parent=1 // pred_fallthru
      _
    // Predicated region
    $region58: #{tpu_custom_call.1} parent=1 // pred_check
      _
    $region59: #{tpu_custom_call.1} parent=1 // pred_check_branch
      %143 = sbr.rel (0) target = $region61
    $region60: #{tpu_custom_call.1} parent=1 // pred_region
      %145 = dma.done [#allocation13], 256
    $region61: #{tpu_custom_call.1} parent=1 // pred_fallthru
      _
    // Predicated region
    $region62: #{tpu_custom_call.1} parent=1 // pred_check
      _
    $region63: #{tpu_custom_call.1} parent=1 // pred_check_branch
      %147 = sbr.rel (0) target = $region65
    $region64: #{tpu_custom_call.1} parent=1 // pred_region
      %149 = dma.done [#allocation13], 256
    $region65: #{tpu_custom_call.1} parent=1 // pred_fallthru
      _
    // Predicated region
    $region66: #{tpu_custom_call.1} parent=1 // pred_check
      _
    $region67: #{tpu_custom_call.1} parent=1 // pred_check_branch
      %151 = sbr.rel (0) target = $region69
    $region68: #{tpu_custom_call.1} parent=1 // pred_region
      %153 = dma.done [#allocation16], 256
    $region69: #{tpu_custom_call.1} parent=1 // pred_fallthru
      _
    // Predicated region
    $region70: #{tpu_custom_call.1} parent=1 // pred_check
      _
    $region71: #{tpu_custom_call.1} parent=1 // pred_check_branch
      %155 = sbr.rel (0) target = $region73
    $region72: #{tpu_custom_call.1} parent=1 // pred_region
      %157 = dma.done [#allocation16], 256
    $region73: #{tpu_custom_call.1} parent=1 // pred_fallthru
      _
    %158 = sfence
    %v159 = vld [vmem:[#allocation4] sm:$0x3]
    %v160 = vld [vmem:[#allocation4 + $0x2] sm:$0x3]
    %v161 = vld [vmem:[#allocation4 + $0x4] sm:$0x3]
    %v162 = vld [vmem:[#allocation4 + $0x6] sm:$0x3]
    %v163 = vld [vmem:[#allocation4 + $0x8] sm:$0x3]
    %v164 = vld [vmem:[#allocation4 + $0xa] sm:$0x3]
    %v165 = vld [vmem:[#allocation4 + $0xc] sm:$0x3]
    %v166 = vld [vmem:[#allocation4 + $0xe] sm:$0x3]
    %s167 = sld [smem:[#allocation8]]
    %v168 = vstv %s167
    %v169 = vmul.f32 %v159, %v168
    %v170 = vmul.f32 %v160, %v168
    %v171 = vmul.f32 %v161, %v168
    %v172 = vmul.f32 %v162, %v168
    %v173 = vmul.f32 %v163, %v168
    %v174 = vmul.f32 %v164, %v168
    %v175 = vmul.f32 %v165, %v168
    %v176 = vmul.f32 %v166, %v168
    %v177 = vadd.f32 %v169, 0.0
    %v178 = vadd.f32 %v170, 0.0
    %v179 = vadd.f32 %v171, 0.0
    %v180 = vadd.f32 %v172, 0.0
    %v181 = vadd.f32 %v173, 0.0
    %v182 = vadd.f32 %v174, 0.0
    %v183 = vadd.f32 %v175, 0.0
    %v184 = vadd.f32 %v176, 0.0
    %s185 = sld [smem:[#allocation8 + $0x1]]
    %v186 = vstv %s185
    %v187 = vmul.f32 %v159, %v186
    %v188 = vmul.f32 %v160, %v186
    %v189 = vmul.f32 %v161, %v186
    %v190 = vmul.f32 %v162, %v186
    %v191 = vmul.f32 %v163, %v186
    %v192 = vmul.f32 %v164, %v186
    %v193 = vmul.f32 %v165, %v186
    %v194 = vmul.f32 %v166, %v186
    %203 = vrot.lane.b32.xlu0 %v187, 127
    %v204 = vpop.permute.xlu0 %203
    %205 = vrot.lane.b32.xlu0 %v188, 127
    %v206 = vpop.permute.xlu0 %205
    %207 = vrot.lane.b32.xlu0 %v189, 127
    %v208 = vpop.permute.xlu0 %207
    %209 = vrot.lane.b32.xlu0 %v190, 127
    %v210 = vpop.permute.xlu0 %209
    %211 = vrot.lane.b32.xlu0 %v191, 127
    %v212 = vpop.permute.xlu0 %211
    %213 = vrot.lane.b32.xlu0 %v192, 127
    %v214 = vpop.permute.xlu0 %213
    %215 = vrot.lane.b32.xlu0 %v193, 127
    %v216 = vpop.permute.xlu0 %215
    %217 = vrot.lane.b32.xlu0 %v194, 127
    %v218 = vpop.permute.xlu0 %217
    %v227 = vadd.f32 %v177, %v204
    %v228 = vadd.f32 %v178, %v206
    %v229 = vadd.f32 %v179, %v208
    %v230 = vadd.f32 %v180, %v210
    %v231 = vadd.f32 %v181, %v212
    %v232 = vadd.f32 %v182, %v214
    %v233 = vadd.f32 %v183, %v216
    %v234 = vadd.f32 %v184, %v218
    %s235 = sld [smem:[#allocation8 + $0x2]]
    %v236 = vstv %s235
    %v237 = vmul.f32 %v159, %v236
    %v238 = vmul.f32 %v160, %v236
    %v239 = vmul.f32 %v161, %v236
    %v240 = vmul.f32 %v162, %v236
    %v241 = vmul.f32 %v163, %v236
    %v242 = vmul.f32 %v164, %v236
    %v243 = vmul.f32 %v165, %v236
    %v244 = vmul.f32 %v166, %v236
    %253 = vrot.lane.b32.xlu0 %v237, 126
    %v254 = vpop.permute.xlu0 %253
    %255 = vrot.lane.b32.xlu0 %v238, 126
    %v256 = vpop.permute.xlu0 %255
    %257 = vrot.lane.b32.xlu0 %v239, 126
    %v258 = vpop.permute.xlu0 %257
    %259 = vrot.lane.b32.xlu0 %v240, 126
    %v260 = vpop.permute.xlu0 %259
    %261 = vrot.lane.b32.xlu0 %v241, 126
    %v262 = vpop.permute.xlu0 %261
    %263 = vrot.lane.b32.xlu0 %v242, 126
    %v264 = vpop.permute.xlu0 %263
    %265 = vrot.lane.b32.xlu0 %v243, 126
    %v266 = vpop.permute.xlu0 %265
    %267 = vrot.lane.b32.xlu0 %v244, 126
    %v268 = vpop.permute.xlu0 %267
    %v277 = vadd.f32 %v227, %v254
    %v278 = vadd.f32 %v228, %v256
    %v279 = vadd.f32 %v229, %v258
    %v280 = vadd.f32 %v230, %v260
    %v281 = vadd.f32 %v231, %v262
    %v282 = vadd.f32 %v232, %v264
    %v283 = vadd.f32 %v233, %v266
    %v284 = vadd.f32 %v234, %v268
    %s285 = sld [smem:[#allocation8 + $0x3]]
    %v286 = vstv %s285
    %v287 = vmul.f32 %v159, %v286
    %v288 = vmul.f32 %v160, %v286
    %v289 = vmul.f32 %v161, %v286
    %v290 = vmul.f32 %v162, %v286
    %v291 = vmul.f32 %v163, %v286
    %v292 = vmul.f32 %v164, %v286
    %v293 = vmul.f32 %v165, %v286
    %v294 = vmul.f32 %v166, %v286
    %v303 = vrot.slane %v287, 1
    %v304 = vrot.slane %v288, 1
    %v305 = vrot.slane %v289, 1
    %v306 = vrot.slane %v290, 1
    %v307 = vrot.slane %v291, 1
    %v308 = vrot.slane %v292, 1
    %v309 = vrot.slane %v293, 1
    %v310 = vrot.slane %v294, 1
    %v319 = vadd.f32 %v277, %v303
    %v320 = vadd.f32 %v278, %v304
    %v321 = vadd.f32 %v279, %v305
    %v322 = vadd.f32 %v280, %v306
    %v323 = vadd.f32 %v281, %v307
    %v324 = vadd.f32 %v282, %v308
    %v325 = vadd.f32 %v283, %v309
    %v326 = vadd.f32 %v284, %v310
    %s327 = sld [smem:[#allocation8 + $0x4]]
    %v328 = vstv %s327
    %v329 = vmul.f32 %v159, %v328
    %v330 = vmul.f32 %v160, %v328
    %v331 = vmul.f32 %v161, %v328
    %v332 = vmul.f32 %v162, %v328
    %v333 = vmul.f32 %v163, %v328
    %v334 = vmul.f32 %v164, %v328
    %v335 = vmul.f32 %v165, %v328
    %v336 = vmul.f32 %v166, %v328
    %v345 = vrot.slane %v329, 1
    %v346 = vrot.slane %v330, 1
    %v347 = vrot.slane %v331, 1
    %v348 = vrot.slane %v332, 1
    %v349 = vrot.slane %v333, 1
    %v350 = vrot.slane %v334, 1
    %v351 = vrot.slane %v335, 1
    %v352 = vrot.slane %v336, 1
    %353 = vrot.lane.b32.xlu0 %v345, 127
    %v354 = vpop.permute.xlu0 %353
    %355 = vrot.lane.b32.xlu0 %v346, 127
    %v356 = vpop.permute.xlu0 %355
    %357 = vrot.lane.b32.xlu0 %v347, 127
    %v358 = vpop.permute.xlu0 %357
    %359 = vrot.lane.b32.xlu0 %v348, 127
    %v360 = vpop.permute.xlu0 %359
    %361 = vrot.lane.b32.xlu0 %v349, 127
    %v362 = vpop.permute.xlu0 %361
    %363 = vrot.lane.b32.xlu0 %v350, 127
    %v364 = vpop.permute.xlu0 %363
    %365 = vrot.lane.b32.xlu0 %v351, 127
    %v366 = vpop.permute.xlu0 %365
    %367 = vrot.lane.b32.xlu0 %v352, 127
    %v368 = vpop.permute.xlu0 %367
    %v377 = vadd.f32 %v319, %v354
    %v378 = vadd.f32 %v320, %v356
    %v379 = vadd.f32 %v321, %v358
    %v380 = vadd.f32 %v322, %v360
    %v381 = vadd.f32 %v323, %v362
    %v382 = vadd.f32 %v324, %v364
    %v383 = vadd.f32 %v325, %v366
    %v384 = vadd.f32 %v326, %v368
    %s385 = sld [smem:[#allocation8 + $0x5]]
    %v386 = vstv %s385
    %v387 = vmul.f32 %v159, %v386
    %v388 = vmul.f32 %v160, %v386
    %v389 = vmul.f32 %v161, %v386
    %v390 = vmul.f32 %v162, %v386
    %v391 = vmul.f32 %v163, %v386
    %v392 = vmul.f32 %v164, %v386
    %v393 = vmul.f32 %v165, %v386
    %v394 = vmul.f32 %v166, %v386
    %v403 = vrot.slane %v387, 1
    %v404 = vrot.slane %v388, 1
    %v405 = vrot.slane %v389, 1
    %v406 = vrot.slane %v390, 1
    %v407 = vrot.slane %v391, 1
    %v408 = vrot.slane %v392, 1
    %v409 = vrot.slane %v393, 1
    %v410 = vrot.slane %v394, 1
    %411 = vrot.lane.b32.xlu0 %v403, 126
    %v412 = vpop.permute.xlu0 %411
    %413 = vrot.lane.b32.xlu0 %v404, 126
    %v414 = vpop.permute.xlu0 %413
    %415 = vrot.lane.b32.xlu0 %v405, 126
    %v416 = vpop.permute.xlu0 %415
    %417 = vrot.lane.b32.xlu0 %v406, 126
    %v418 = vpop.permute.xlu0 %417
    %419 = vrot.lane.b32.xlu0 %v407, 126
    %v420 = vpop.permute.xlu0 %419
    %421 = vrot.lane.b32.xlu0 %v408, 126
    %v422 = vpop.permute.xlu0 %421
    %423 = vrot.lane.b32.xlu0 %v409, 126
    %v424 = vpop.permute.xlu0 %423
    %425 = vrot.lane.b32.xlu0 %v410, 126
    %v426 = vpop.permute.xlu0 %425
    %v435 = vadd.f32 %v377, %v412
    %v436 = vadd.f32 %v378, %v414
    %v437 = vadd.f32 %v379, %v416
    %v438 = vadd.f32 %v380, %v418
    %v439 = vadd.f32 %v381, %v420
    %v440 = vadd.f32 %v382, %v422
    %v441 = vadd.f32 %v383, %v424
    %v442 = vadd.f32 %v384, %v426
    %s443 = sld [smem:[#allocation3]]
    %v444 = vstv %s443
    %v445 = vadd.f32 %v435, %v444
    %v446 = vadd.f32 %v436, %v444
    %v447 = vadd.f32 %v437, %v444
    %v448 = vadd.f32 %v438, %v444
    %v449 = vadd.f32 %v439, %v444
    %v450 = vadd.f32 %v440, %v444
    %v451 = vadd.f32 %v441, %v444
    %v452 = vadd.f32 %v442, %v444
    %v453 = vmax.f32 %v445, 0.0
    %v454 = vmax.f32 %v446, 0.0
    %v455 = vmax.f32 %v447, 0.0
    %v456 = vmax.f32 %v448, 0.0
    %v457 = vmax.f32 %v449, 0.0
    %v458 = vmax.f32 %v450, 0.0
    %v459 = vmax.f32 %v451, 0.0
    %v460 = vmax.f32 %v452, 0.0
    %vm461 = vcmask 130048
    %462 = vst.msk [vmem:[#allocation2] sm:$0xff] %vm461, 0.0
    %v471 = vrot.slane %v454, 7
    %vm472 = vcmask 1041409
    %v473 = vsel %vm472, %v471, %v453
    %v474 = vrot.slane %v455, 6
    %vm475 = vcmask 1042434
    %v476 = vsel %vm475, %v474, %v473
    %v477 = vrot.slane %v456, 5
    %vm478 = vcmask 1043459
    %v479 = vsel %vm478, %v477, %v476
    %v480 = vrot.slane %v457, 4
    %vm481 = vcmask 1044484
    %v482 = vsel %vm481, %v480, %v479
    %v483 = vrot.slane %v458, 3
    %vm484 = vcmask 1045509
    %v485 = vsel %vm484, %v483, %v482
    %v486 = vrot.slane %v459, 2
    %vm487 = vcmask 1046534
    %v488 = vsel %vm487, %v486, %v485
    %v489 = vrot.slane %v460, 1
    %vm490 = vcmask 1047559
    %v491 = vsel %vm490, %v489, %v488
    %vm493 = vcmask 113664
    %494 = vst.msk [vmem:[#allocation2] sm:$0xff] %vm493, %v491
    %v495 = vld [vmem:[#allocation2] sm:$0xff]
    %v496 = vlaneseq
    %v497 = vshrl.u32 %v496, 7
    loop: start=0, step=1, limit=16
    $region74: #{tpu_custom_call.1} parent=1 // loop_pre_header
      _
    $region75: #{tpu_custom_call.1} parent=1 // loop_header
      %s499 = sphi 0, %s503
      %p500 = scmp.ge.s32.totalorder %s499, 16
      %v504 = vphi %v495, %v1125
    $region76: #{tpu_custom_call.1} parent=1 // loop_header_branch
      %502 = sbr.rel (%p500) target = $region80
    $region77: #{tpu_custom_call.1} parent=1 // loop_body
      %s505 = smul.u32 %s499, 16
      %s506 = scalar_lea.vmem [#allocation9], %s505
      %v507 = vld [vmem:[%s506] sm:$0xff]
      %v508 = vld [vmem:[%s506 + $0x8] sm:$0xff]
      %s509 = scalar_lea.vmem [#allocation11], %s505
      %v510 = vld [vmem:[%s509] sm:$0xff]
      %v511 = vld [vmem:[%s509 + $0x8] sm:$0xff]
      %s512 = scalar_lea.vmem [#allocation12], %s499
      %v513 = vld [vmem:[%s512] sm:$0x1]
      %v515 = vperm.slane %v513, 0
      %v518 = vsel %vm461, %v504, 0
      %520 = vmatpush.msra.mxu0 0.0
      %521 = vmatpush.msra.mxu0 0.0
      %522 = vmatpush.msra.mxu0 0.0
      %523 = vmatpush.msra.mxu0 0.0
      %524 = vmatpush.msra.mxu0 0.0
      %525 = vmatpush.msra.mxu0 0.0
      %526 = vmatpush.msra.mxu0 0.0
      %527 = vmatpush.msra.mxu0 0.0
      %528 = vmatpush.msra.mxu0 0.0
      %529 = vmatpush.msra.mxu0 0.0
      %530 = vmatpush.msra.mxu0 0.0
      %531 = vmatpush.msra.mxu0 0.0
      %532 = vmatpush.msra.mxu0 0.0
      %533 = vmatpush.msra.mxu0 0.0
      %534 = vmatpush.msra.mxu0 %v508
      %535 = vmatpush.msra.mxu0 %v507
      %536 = vmatmul.f32.gmra.mxu0 %v518
      %v537 = vpop.f32.mrf.mxu0
      %v538 = vadd.f32 %v515, %v537
      %539 = vdwg.mxu0
      %s540 = scalar_lea.vmem [#allocation14], %s499
      %v541 = vld [vmem:[%s540] sm:$0x1]
      %s542 = scalar_lea.vmem [#allocation15], %s499
      %v543 = vld [vmem:[%s542] sm:$0x1]
      %v545 = vsel %vm461, %v541, 0
      %547 = vmatpush.msra.mxu0 0.0
      %548 = vmatpush.msra.mxu0 0.0
      %549 = vmatpush.msra.mxu0 0.0
      %550 = vmatpush.msra.mxu0 0.0
      %551 = vmatpush.msra.mxu0 0.0
      %552 = vmatpush.msra.mxu0 0.0
      %553 = vmatpush.msra.mxu0 0.0
      %554 = vmatpush.msra.mxu0 0.0
      %555 = vmatpush.msra.mxu0 0.0
      %556 = vmatpush.msra.mxu0 0.0
      %557 = vmatpush.msra.mxu0 0.0
      %558 = vmatpush.msra.mxu0 0.0
      %559 = vmatpush.msra.mxu0 0.0
      %560 = vmatpush.msra.mxu0 0.0
      %561 = vmatpush.msra.mxu0 %v511
      %562 = vmatpush.msra.mxu0 %v510
      %563 = vmatmul.f32.gmra.mxu0 %v545
      %v564 = vpop.f32.mrf.mxu0
      %v565 = vadd.f32 0.0, %v564
      %566 = vdwg.mxu0
      %v567 = vadd.f32 %v538, %v565
      %v568 = vsub.f32 0.0, %v567
      %v569 = vmul.f32 %v568, 1.442695
      %v570 = vpow.pop %v569
      %v571 = vadd.f32 %v570, 1.0
      %v572 = vrcp.pop %v571
      %v573 = vmul.f32 %v571, %v572
      %v574 = vsub.f32 1.0, %v573
      %v575 = vmul.f32 %v572, %v574
      %v576 = vadd.f32 %v572, %v575
      %vm577 = vweird.f32 %v571
      %vm578 = vweird.f32 %v572
      %vm579 = vmor %vm577, %vm578
      %v580 = vsel %vm579, %v572, %v576
      %v581 = vand.u32 2147483647, %v571
      %vm582 = vcmp.eq.f32.partialorder %v581, 8.507059e+37
      %v583 = vand.u32 %v571, 2147483648
      %v584 = vor.u32 1.1754944e-38, %v583
      %v585 = vsel %vm582, %v584, %v580
      %v586 = vmul.f32 1.0, %v585
      %v587 = vtanh.pop %v567
      %v589 = vperm.slane %v543, 0
      %590 = vrot.lane.b32.xlu0 %v589, 16
      %v591 = vpop.permute.xlu0 %590
      %v593 = vmul.f32 %v586, %v591
      %595 = vrot.lane.b32.xlu0 %v587, 96
      %v596 = vpop.permute.xlu0 %595
      %v598 = vmul.f32 %v586, %v596
      %600 = vrot.lane.b32.xlu0 %v598, 16
      %v601 = vpop.permute.xlu0 %600
      %v603 = vadd.f32 %v593, %v601
      %v604 = vtanh.pop %v603
      %606 = vrot.lane.b32.xlu0 %v604, 32
      %v607 = vpop.permute.xlu0 %606
      %v609 = vmul.f32 %v586, %v607
      %vm610 = vcmp.eq.s32.totalorder %v497, 0
      %v611 = vperm.slane %v609, 0
      %v612 = vsel %vm610, %v611, 0.0
      %614 = vrot.lane.b32.xlu0 %v609, 80
      %v615 = vpop.permute.xlu0 %614
      %v616 = vsel %vm461, %v615, 0
      %618 = vmatpush.msra.mxu0 0.0
      %619 = vmatpush.msra.mxu0 0.0
      %620 = vmatpush.msra.mxu0 0.0
      %621 = vmatpush.msra.mxu0 0.0
      %622 = vmatpush.msra.mxu0 0.0
      %623 = vmatpush.msra.mxu0 0.0
      %624 = vmatpush.msra.mxu0 0.0
      %625 = vmatpush.msra.mxu0 0.0
      %626 = vmatpush.msra.mxu0 0.0
      %627 = vmatpush.msra.mxu0 0.0
      %628 = vmatpush.msra.mxu0 0.0
      %629 = vmatpush.msra.mxu0 0.0
      %630 = vmatpush.msra.mxu0 0.0
      %631 = vmatpush.msra.mxu0 0.0
      %632 = vmatpush.msra.mxu0 %v511
      %633 = vmatpush.msra.mxu0 %v510
      %634 = vmatmul.f32.gmra.mxu0 %v616
      %v635 = vpop.f32.mrf.mxu0
      %v636 = vadd.f32 0.0, %v635
      %637 = vdwg.mxu0
      %v639 = vrot.slane %v636, 7
      %v641 = vadd.f32 %v538, %v639
      %v642 = vsub.f32 0.0, %v641
      %v643 = vmul.f32 %v642, 1.442695
      %v644 = vpow.pop %v643
      %v645 = vadd.f32 %v644, 1.0
      %v646 = vrcp.pop %v645
      %v647 = vmul.f32 %v645, %v646
      %v648 = vsub.f32 1.0, %v647
      %v649 = vmul.f32 %v646, %v648
      %v650 = vadd.f32 %v646, %v649
      %vm651 = vweird.f32 %v645
      %vm652 = vweird.f32 %v646
      %vm653 = vmor %vm651, %vm652
      %v654 = vsel %vm653, %v646, %v650
      %v655 = vand.u32 2147483647, %v645
      %vm656 = vcmp.eq.f32.partialorder %v655, 8.507059e+37
      %v657 = vand.u32 %v645, 2147483648
      %v658 = vor.u32 1.1754944e-38, %v657
      %v659 = vsel %vm656, %v658, %v654
      %v660 = vmul.f32 1.0, %v659
      %v661 = vtanh.pop %v641
      %v663 = vrot.slane %v603, 7
      %v665 = vmul.f32 %v660, %v663
      %667 = vrot.lane.b32.xlu0 %v661, 96
      %v668 = vpop.permute.xlu0 %667
      %v670 = vmul.f32 %v660, %v668
      %672 = vrot.lane.b32.xlu0 %v670, 16
      %v673 = vpop.permute.xlu0 %672
      %v675 = vadd.f32 %v665, %v673
      %v676 = vtanh.pop %v675
      %678 = vrot.lane.b32.xlu0 %v676, 32
      %v679 = vpop.permute.xlu0 %678
      %v681 = vmul.f32 %v660, %v679
      %vm682 = vcmp.eq.s32.totalorder %v497, 1
      %v683 = vperm.slane %v681, 1
      %v684 = vsel %vm682, %v683, %v612
      %v686 = vrot.slane %v681, 1
      %687 = vrot.lane.b32.xlu0 %v686, 80
      %v688 = vpop.permute.xlu0 %687
      %v689 = vsel %vm461, %v688, 0
      %691 = vmatpush.msra.mxu0 0.0
      %692 = vmatpush.msra.mxu0 0.0
      %693 = vmatpush.msra.mxu0 0.0
      %694 = vmatpush.msra.mxu0 0.0
      %695 = vmatpush.msra.mxu0 0.0
      %696 = vmatpush.msra.mxu0 0.0
      %697 = vmatpush.msra.mxu0 0.0
      %698 = vmatpush.msra.mxu0 0.0
      %699 = vmatpush.msra.mxu0 0.0
      %700 = vmatpush.msra.mxu0 0.0
      %701 = vmatpush.msra.mxu0 0.0
      %702 = vmatpush.msra.mxu0 0.0
      %703 = vmatpush.msra.mxu0 0.0
      %704 = vmatpush.msra.mxu0 0.0
      %705 = vmatpush.msra.mxu0 %v511
      %706 = vmatpush.msra.mxu0 %v510
      %707 = vmatmul.f32.gmra.mxu0 %v689
      %v708 = vpop.f32.mrf.mxu0
      %v709 = vadd.f32 0.0, %v708
      %710 = vdwg.mxu0
      %v712 = vrot.slane %v709, 6
      %v714 = vadd.f32 %v538, %v712
      %v715 = vsub.f32 0.0, %v714
      %v716 = vmul.f32 %v715, 1.442695
      %v717 = vpow.pop %v716
      %v718 = vadd.f32 %v717, 1.0
      %v719 = vrcp.pop %v718
      %v720 = vmul.f32 %v718, %v719
      %v721 = vsub.f32 1.0, %v720
      %v722 = vmul.f32 %v719, %v721
      %v723 = vadd.f32 %v719, %v722
      %vm724 = vweird.f32 %v718
      %vm725 = vweird.f32 %v719
      %vm726 = vmor %vm724, %vm725
      %v727 = vsel %vm726, %v719, %v723
      %v728 = vand.u32 2147483647, %v718
      %vm729 = vcmp.eq.f32.partialorder %v728, 8.507059e+37
      %v730 = vand.u32 %v718, 2147483648
      %v731 = vor.u32 1.1754944e-38, %v730
      %v732 = vsel %vm729, %v731, %v727
      %v733 = vmul.f32 1.0, %v732
      %v734 = vtanh.pop %v714
      %v736 = vrot.slane %v675, 7
      %v738 = vmul.f32 %v733, %v736
      %740 = vrot.lane.b32.xlu0 %v734, 96
      %v741 = vpop.permute.xlu0 %740
      %v743 = vmul.f32 %v733, %v741
      %745 = vrot.lane.b32.xlu0 %v743, 16
      %v746 = vpop.permute.xlu0 %745
      %v748 = vadd.f32 %v738, %v746
      %v749 = vtanh.pop %v748
      %751 = vrot.lane.b32.xlu0 %v749, 32
      %v752 = vpop.permute.xlu0 %751
      %v754 = vmul.f32 %v733, %v752
      %vm755 = vcmp.eq.s32.totalorder %v497, 2
      %v756 = vperm.slane %v754, 2
      %v757 = vsel %vm755, %v756, %v684
      %v759 = vrot.slane %v754, 2
      %760 = vrot.lane.b32.xlu0 %v759, 80
      %v761 = vpop.permute.xlu0 %760
      %v762 = vsel %vm461, %v761, 0
      %764 = vmatpush.msra.mxu0 0.0
      %765 = vmatpush.msra.mxu0 0.0
      %766 = vmatpush.msra.mxu0 0.0
      %767 = vmatpush.msra.mxu0 0.0
      %768 = vmatpush.msra.mxu0 0.0
      %769 = vmatpush.msra.mxu0 0.0
      %770 = vmatpush.msra.mxu0 0.0
      %771 = vmatpush.msra.mxu0 0.0
      %772 = vmatpush.msra.mxu0 0.0
      %773 = vmatpush.msra.mxu0 0.0
      %774 = vmatpush.msra.mxu0 0.0
      %775 = vmatpush.msra.mxu0 0.0
      %776 = vmatpush.msra.mxu0 0.0
      %777 = vmatpush.msra.mxu0 0.0
      %778 = vmatpush.msra.mxu0 %v511
      %779 = vmatpush.msra.mxu0 %v510
      %780 = vmatmul.f32.gmra.mxu0 %v762
      %v781 = vpop.f32.mrf.mxu0
      %v782 = vadd.f32 0.0, %v781
      %783 = vdwg.mxu0
      %v785 = vrot.slane %v782, 5
      %v787 = vadd.f32 %v538, %v785
      %v788 = vsub.f32 0.0, %v787
      %v789 = vmul.f32 %v788, 1.442695
      %v790 = vpow.pop %v789
      %v791 = vadd.f32 %v790, 1.0
      %v792 = vrcp.pop %v791
      %v793 = vmul.f32 %v791, %v792
      %v794 = vsub.f32 1.0, %v793
      %v795 = vmul.f32 %v792, %v794
      %v796 = vadd.f32 %v792, %v795
      %vm797 = vweird.f32 %v791
      %vm798 = vweird.f32 %v792
      %vm799 = vmor %vm797, %vm798
      %v800 = vsel %vm799, %v792, %v796
      %v801 = vand.u32 2147483647, %v791
      %vm802 = vcmp.eq.f32.partialorder %v801, 8.507059e+37
      %v803 = vand.u32 %v791, 2147483648
      %v804 = vor.u32 1.1754944e-38, %v803
      %v805 = vsel %vm802, %v804, %v800
      %v806 = vmul.f32 1.0, %v805
      %v807 = vtanh.pop %v787
      %v809 = vrot.slane %v748, 7
      %v811 = vmul.f32 %v806, %v809
      %813 = vrot.lane.b32.xlu0 %v807, 96
      %v814 = vpop.permute.xlu0 %813
      %v816 = vmul.f32 %v806, %v814
      %818 = vrot.lane.b32.xlu0 %v816, 16
      %v819 = vpop.permute.xlu0 %818
      %v821 = vadd.f32 %v811, %v819
      %v822 = vtanh.pop %v821
      %824 = vrot.lane.b32.xlu0 %v822, 32
      %v825 = vpop.permute.xlu0 %824
      %v827 = vmul.f32 %v806, %v825
      %vm828 = vcmp.eq.s32.totalorder %v497, 3
      %v829 = vperm.slane %v827, 3
      %v830 = vsel %vm828, %v829, %v757
      %v832 = vrot.slane %v827, 3
      %833 = vrot.lane.b32.xlu0 %v832, 80
      %v834 = vpop.permute.xlu0 %833
      %v835 = vsel %vm461, %v834, 0
      %837 = vmatpush.msra.mxu0 0.0
      %838 = vmatpush.msra.mxu0 0.0
      %839 = vmatpush.msra.mxu0 0.0
      %840 = vmatpush.msra.mxu0 0.0
      %841 = vmatpush.msra.mxu0 0.0
      %842 = vmatpush.msra.mxu0 0.0
      %843 = vmatpush.msra.mxu0 0.0
      %844 = vmatpush.msra.mxu0 0.0
      %845 = vmatpush.msra.mxu0 0.0
      %846 = vmatpush.msra.mxu0 0.0
      %847 = vmatpush.msra.mxu0 0.0
      %848 = vmatpush.msra.mxu0 0.0
      %849 = vmatpush.msra.mxu0 0.0
      %850 = vmatpush.msra.mxu0 0.0
      %851 = vmatpush.msra.mxu0 %v511
      %852 = vmatpush.msra.mxu0 %v510
      %853 = vmatmul.f32.gmra.mxu0 %v835
      %v854 = vpop.f32.mrf.mxu0
      %v855 = vadd.f32 0.0, %v854
      %856 = vdwg.mxu0
      %v858 = vrot.slane %v855, 4
      %v860 = vadd.f32 %v538, %v858
      %v861 = vsub.f32 0.0, %v860
      %v862 = vmul.f32 %v861, 1.442695
      %v863 = vpow.pop %v862
      %v864 = vadd.f32 %v863, 1.0
      %v865 = vrcp.pop %v864
      %v866 = vmul.f32 %v864, %v865
      %v867 = vsub.f32 1.0, %v866
      %v868 = vmul.f32 %v865, %v867
      %v869 = vadd.f32 %v865, %v868
      %vm870 = vweird.f32 %v864
      %vm871 = vweird.f32 %v865
      %vm872 = vmor %vm870, %vm871
      %v873 = vsel %vm872, %v865, %v869
      %v874 = vand.u32 2147483647, %v864
      %vm875 = vcmp.eq.f32.partialorder %v874, 8.507059e+37
      %v876 = vand.u32 %v864, 2147483648
      %v877 = vor.u32 1.1754944e-38, %v876
      %v878 = vsel %vm875, %v877, %v873
      %v879 = vmul.f32 1.0, %v878
      %v880 = vtanh.pop %v860
      %v882 = vrot.slane %v821, 7
      %v884 = vmul.f32 %v879, %v882
      %886 = vrot.lane.b32.xlu0 %v880, 96
      %v887 = vpop.permute.xlu0 %886
      %v889 = vmul.f32 %v879, %v887
      %891 = vrot.lane.b32.xlu0 %v889, 16
      %v892 = vpop.permute.xlu0 %891
      %v894 = vadd.f32 %v884, %v892
      %v895 = vtanh.pop %v894
      %897 = vrot.lane.b32.xlu0 %v895, 32
      %v898 = vpop.permute.xlu0 %897
      %v900 = vmul.f32 %v879, %v898
      %vm901 = vcmp.eq.s32.totalorder %v497, 4
      %v902 = vperm.slane %v900, 4
      %v903 = vsel %vm901, %v902, %v830
      %v905 = vrot.slane %v900, 4
      %906 = vrot.lane.b32.xlu0 %v905, 80
      %v907 = vpop.permute.xlu0 %906
      %v908 = vsel %vm461, %v907, 0
      %910 = vmatpush.msra.mxu0 0.0
      %911 = vmatpush.msra.mxu0 0.0
      %912 = vmatpush.msra.mxu0 0.0
      %913 = vmatpush.msra.mxu0 0.0
      %914 = vmatpush.msra.mxu0 0.0
      %915 = vmatpush.msra.mxu0 0.0
      %916 = vmatpush.msra.mxu0 0.0
      %917 = vmatpush.msra.mxu0 0.0
      %918 = vmatpush.msra.mxu0 0.0
      %919 = vmatpush.msra.mxu0 0.0
      %920 = vmatpush.msra.mxu0 0.0
      %921 = vmatpush.msra.mxu0 0.0
      %922 = vmatpush.msra.mxu0 0.0
      %923 = vmatpush.msra.mxu0 0.0
      %924 = vmatpush.msra.mxu0 %v511
      %925 = vmatpush.msra.mxu0 %v510
      %926 = vmatmul.f32.gmra.mxu0 %v908
      %v927 = vpop.f32.mrf.mxu0
      %v928 = vadd.f32 0.0, %v927
      %929 = vdwg.mxu0
      %v931 = vrot.slane %v928, 3
      %v933 = vadd.f32 %v538, %v931
      %v934 = vsub.f32 0.0, %v933
      %v935 = vmul.f32 %v934, 1.442695
      %v936 = vpow.pop %v935
      %v937 = vadd.f32 %v936, 1.0
      %v938 = vrcp.pop %v937
      %v939 = vmul.f32 %v937, %v938
      %v940 = vsub.f32 1.0, %v939
      %v941 = vmul.f32 %v938, %v940
      %v942 = vadd.f32 %v938, %v941
      %vm943 = vweird.f32 %v937
      %vm944 = vweird.f32 %v938
      %vm945 = vmor %vm943, %vm944
      %v946 = vsel %vm945, %v938, %v942
      %v947 = vand.u32 2147483647, %v937
      %vm948 = vcmp.eq.f32.partialorder %v947, 8.507059e+37
      %v949 = vand.u32 %v937, 2147483648
      %v950 = vor.u32 1.1754944e-38, %v949
      %v951 = vsel %vm948, %v950, %v946
      %v952 = vmul.f32 1.0, %v951
      %v953 = vtanh.pop %v933
      %v955 = vrot.slane %v894, 7
      %v957 = vmul.f32 %v952, %v955
      %959 = vrot.lane.b32.xlu0 %v953, 96
      %v960 = vpop.permute.xlu0 %959
      %v962 = vmul.f32 %v952, %v960
      %964 = vrot.lane.b32.xlu0 %v962, 16
      %v965 = vpop.permute.xlu0 %964
      %v967 = vadd.f32 %v957, %v965
      %v968 = vtanh.pop %v967
      %970 = vrot.lane.b32.xlu0 %v968, 32
      %v971 = vpop.permute.xlu0 %970
      %v973 = vmul.f32 %v952, %v971
      %vm974 = vcmp.eq.s32.totalorder %v497, 5
      %v975 = vperm.slane %v973, 5
      %v976 = vsel %vm974, %v975, %v903
      %v978 = vrot.slane %v973, 5
      %979 = vrot.lane.b32.xlu0 %v978, 80
      %v980 = vpop.permute.xlu0 %979
      %v981 = vsel %vm461, %v980, 0
      %983 = vmatpush.msra.mxu0 0.0
      %984 = vmatpush.msra.mxu0 0.0
      %985 = vmatpush.msra.mxu0 0.0
      %986 = vmatpush.msra.mxu0 0.0
      %987 = vmatpush.msra.mxu0 0.0
      %988 = vmatpush.msra.mxu0 0.0
      %989 = vmatpush.msra.mxu0 0.0
      %990 = vmatpush.msra.mxu0 0.0
      %991 = vmatpush.msra.mxu0 0.0
      %992 = vmatpush.msra.mxu0 0.0
      %993 = vmatpush.msra.mxu0 0.0
      %994 = vmatpush.msra.mxu0 0.0
      %995 = vmatpush.msra.mxu0 0.0
      %996 = vmatpush.msra.mxu0 0.0
      %997 = vmatpush.msra.mxu0 %v511
      %998 = vmatpush.msra.mxu0 %v510
      %999 = vmatmul.f32.gmra.mxu0 %v981
      %v1000 = vpop.f32.mrf.mxu0
      %v1001 = vadd.f32 0.0, %v1000
      %1002 = vdwg.mxu0
      %v1004 = vrot.slane %v1001, 2
      %v1006 = vadd.f32 %v538, %v1004
      %v1007 = vsub.f32 0.0, %v1006
      %v1008 = vmul.f32 %v1007, 1.442695
      %v1009 = vpow.pop %v1008
      %v1010 = vadd.f32 %v1009, 1.0
      %v1011 = vrcp.pop %v1010
      %v1012 = vmul.f32 %v1010, %v1011
      %v1013 = vsub.f32 1.0, %v1012
      %v1014 = vmul.f32 %v1011, %v1013
      %v1015 = vadd.f32 %v1011, %v1014
      %vm1016 = vweird.f32 %v1010
      %vm1017 = vweird.f32 %v1011
      %vm1018 = vmor %vm1016, %vm1017
      %v1019 = vsel %vm1018, %v1011, %v1015
      %v1020 = vand.u32 2147483647, %v1010
      %vm1021 = vcmp.eq.f32.partialorder %v1020, 8.507059e+37
      %v1022 = vand.u32 %v1010, 2147483648
      %v1023 = vor.u32 1.1754944e-38, %v1022
      %v1024 = vsel %vm1021, %v1023, %v1019
      %v1025 = vmul.f32 1.0, %v1024
      %v1026 = vtanh.pop %v1006
      %v1028 = vrot.slane %v967, 7
      %v1030 = vmul.f32 %v1025, %v1028
      %1032 = vrot.lane.b32.xlu0 %v1026, 96
      %v1033 = vpop.permute.xlu0 %1032
      %v1035 = vmul.f32 %v1025, %v1033
      %1037 = vrot.lane.b32.xlu0 %v1035, 16
      %v1038 = vpop.permute.xlu0 %1037
      %v1040 = vadd.f32 %v1030, %v1038
      %v1041 = vtanh.pop %v1040
      %1043 = vrot.lane.b32.xlu0 %v1041, 32
      %v1044 = vpop.permute.xlu0 %1043
      %v1046 = vmul.f32 %v1025, %v1044
      %vm1047 = vcmp.eq.s32.totalorder %v497, 6
      %v1048 = vperm.slane %v1046, 6
      %v1049 = vsel %vm1047, %v1048, %v976
      %v1051 = vrot.slane %v1046, 6
      %1052 = vrot.lane.b32.xlu0 %v1051, 80
      %v1053 = vpop.permute.xlu0 %1052
      %v1054 = vsel %vm461, %v1053, 0
      %1056 = vmatpush.msra.mxu0 0.0
      %1057 = vmatpush.msra.mxu0 0.0
      %1058 = vmatpush.msra.mxu0 0.0
      %1059 = vmatpush.msra.mxu0 0.0
      %1060 = vmatpush.msra.mxu0 0.0
      %1061 = vmatpush.msra.mxu0 0.0
      %1062 = vmatpush.msra.mxu0 0.0
      %1063 = vmatpush.msra.mxu0 0.0
      %1064 = vmatpush.msra.mxu0 0.0
      %1065 = vmatpush.msra.mxu0 0.0
      %1066 = vmatpush.msra.mxu0 0.0
      %1067 = vmatpush.msra.mxu0 0.0
      %1068 = vmatpush.msra.mxu0 0.0
      %1069 = vmatpush.msra.mxu0 0.0
      %1070 = vmatpush.msra.mxu0 %v511
      %1071 = vmatpush.msra.mxu0 %v510
      %1072 = vmatmul.f32.gmra.mxu0 %v1054
      %v1073 = vpop.f32.mrf.mxu0
      %v1074 = vadd.f32 0.0, %v1073
      %1075 = vdwg.mxu0
      %v1077 = vrot.slane %v1074, 1
      %v1079 = vadd.f32 %v538, %v1077
      %v1080 = vsub.f32 0.0, %v1079
      %v1081 = vmul.f32 %v1080, 1.442695
      %v1082 = vpow.pop %v1081
      %v1083 = vadd.f32 %v1082, 1.0
      %v1084 = vrcp.pop %v1083
      %v1085 = vmul.f32 %v1083, %v1084
      %v1086 = vsub.f32 1.0, %v1085
      %v1087 = vmul.f32 %v1084, %v1086
      %v1088 = vadd.f32 %v1084, %v1087
      %vm1089 = vweird.f32 %v1083
      %vm1090 = vweird.f32 %v1084
      %vm1091 = vmor %vm1089, %vm1090
      %v1092 = vsel %vm1091, %v1084, %v1088
      %v1093 = vand.u32 2147483647, %v1083
      %vm1094 = vcmp.eq.f32.partialorder %v1093, 8.507059e+37
      %v1095 = vand.u32 %v1083, 2147483648
      %v1096 = vor.u32 1.1754944e-38, %v1095
      %v1097 = vsel %vm1094, %v1096, %v1092
      %v1098 = vmul.f32 1.0, %v1097
      %v1099 = vtanh.pop %v1079
      %v1101 = vrot.slane %v1040, 7
      %v1103 = vmul.f32 %v1098, %v1101
      %1105 = vrot.lane.b32.xlu0 %v1099, 96
      %v1106 = vpop.permute.xlu0 %1105
      %v1108 = vmul.f32 %v1098, %v1106
      %1110 = vrot.lane.b32.xlu0 %v1108, 16
      %v1111 = vpop.permute.xlu0 %1110
      %v1113 = vadd.f32 %v1103, %v1111
      %v1114 = vtanh.pop %v1113
      %1116 = vrot.lane.b32.xlu0 %v1114, 32
      %v1117 = vpop.permute.xlu0 %1116
      %v1119 = vmul.f32 %v1098, %v1117
      %vm1120 = vcmp.eq.s32.totalorder %v497, 7
      %v1121 = vperm.slane %v1119, 7
      %v1122 = vsel %vm1120, %v1121, %v1049
      %1124 = vrot.lane.b32.xlu0 %v1122, 80
      %v1125 = vpop.permute.xlu0 %1124
    $region78: #{tpu_custom_call.1} parent=1 // loop_footer
      %s503 = sadd.s32 1, %s499
    $region79: #{tpu_custom_call.1} parent=1 // loop_footer_branch
      %498 = sbr.rel target = $region75
    $region80: #{tpu_custom_call.1} parent=1 // loop_exit
      _
    %v1127 = vld [vmem:[#allocation17] sm:$0xff]
    %v1128 = vld [vmem:[#allocation17 + $0x8] sm:$0xff]
    %v1129 = vld [vmem:[%s9] sm:$0x1]
    %v1131 = vperm.slane %v1129, 0
    %v1134 = vsel %vm461, %v504, 0
    %1136 = vmatpush.msra.mxu0 0.0
    %1137 = vmatpush.msra.mxu0 0.0
    %1138 = vmatpush.msra.mxu0 0.0
    %1139 = vmatpush.msra.mxu0 0.0
    %1140 = vmatpush.msra.mxu0 0.0
    %1141 = vmatpush.msra.mxu0 0.0
    %1142 = vmatpush.msra.mxu0 0.0
    %1143 = vmatpush.msra.mxu0 0.0
    %1144 = vmatpush.msra.mxu0 0.0
    %1145 = vmatpush.msra.mxu0 0.0
    %1146 = vmatpush.msra.mxu0 0.0
    %1147 = vmatpush.msra.mxu0 0.0
    %1148 = vmatpush.msra.mxu0 0.0
    %1149 = vmatpush.msra.mxu0 0.0
    %1150 = vmatpush.msra.mxu0 %v1128
    %1151 = vmatpush.msra.mxu0 %v1127
    %1152 = vmatmul.f32.gmra.mxu0 %v1134
    %v1153 = vpop.f32.mrf.mxu0
    %v1154 = vadd.f32 %v1131, %v1153
    %1155 = vdwg.mxu0
    %1156 = vst.msk [vmem:[#allocation18] sm:$0xff] %vm461, %v1154
    // Predicated region
    $region81: #{tpu_custom_call.1} parent=1 // pred_check
      _
    $region82: #{tpu_custom_call.1} parent=1 // pred_check_branch
      %1158 = sbr.rel (0) target = $region84
    $region83: #{tpu_custom_call.1} parent=1 // pred_region
      %1160 = vsyncadd [#allocation6], 0
      %s1162 = sshll.u32 [#allocation18], 4
      %s1163 = int_to_ptr.vmem [resolvable:$true] %s1162
      %s1164 = sshll.u32 %s10, 4
      %s1165 = int_to_ptr.hbm [resolvable:$true] %s1164
      %1167 = dma.vmem_to_hbm [thread:$0]  %s1163, 128, %s1165, [#allocation6]
    $region84: #{tpu_custom_call.1} parent=1 // pred_fallthru
      _
    // Predicated region
    $region85: #{tpu_custom_call.1} parent=1 // pred_check
      _
    $region86: #{tpu_custom_call.1} parent=1 // pred_check_branch
      %1169 = sbr.rel (0) target = $region88
    $region87: #{tpu_custom_call.1} parent=1 // pred_region
      %1171 = dma.done [#allocation6], 128
    $region88: #{tpu_custom_call.1} parent=1 // pred_fallthru
      _
    %1172 = vsyncpa [#allocation5], 1
    %1173 = vsyncpa [#allocation10], 1
    %1174 = vsyncpa [#allocation13], 1
    %1175 = vsyncpa [#allocation16], 1
    %1176 = vsyncpa [#allocation6], 1
    %1177 = vsyncpa [#allocation7], 1

</llo_original>
